<compile_context>
chip_gen: v6e
topology: v6e:2x2x1
jax: 0.10.0
libtpu: 0.0.40
codegen_flags: <defaults>
</compile_context>

<pallas_src>
import functools

import jax
import jax.numpy as jnp
from jax.experimental import pallas as pl
from jax.experimental.pallas import tpu as pltpu

LN_EPS = 1e-5


def lane_node_encoder_kernel(
    lane_ref,   # [TB, D]       natural layout (batch on sublanes)
    rot_ref,    # [TB, D*D]     row-major flatten of rotate_mat[b, d, e]
    r_ref,      # [D, D*D]      replication matrix: R[d, d*D+e] = 1
    w1t_ref,    # [D*D, E]      W1 tiled D times along rows: W1_tiled[d*D+e, j] = W1[e, j]
    vecs_ref,   # [4, E]        rows: b1, gamma, beta, b2
    w2_ref,     # [E, E]        natural W2
    out_ref,    # [TB, E]
):
    lane = lane_ref[...].astype(jnp.float32)                      # [TB, D]
    rot = rot_ref[...].astype(jnp.float32)                        # [TB, D*D]

    # lane_rep[b, d*D+e] = lane[b, d]  (tiny-K MXU matmul; avoids lane-sparse
    # VPU strips and any in-kernel transpose/repeat).
    lane_rep = jnp.dot(lane, r_ref[...], preferred_element_type=jnp.float32)

    # prod[b, d*D+e] = lane[b, d] * rot[b, d, e]   (lane-dense VPU multiply)
    prod = lane_rep * rot                                         # [TB, D*D]

    # Fused rotation + linear-1:
    #   h[b, j] = sum_{d,e} lane[b,d] * rot[b,d,e] * W1[e,j] + b1[j]
    h = jnp.dot(prod, w1t_ref[...], preferred_element_type=jnp.float32)
    h = h + vecs_ref[0:1, :]                                      # + b1

    # LayerNorm over the feature (lane) axis; biased variance, eps=1e-5 (torch).
    mu = jnp.mean(h, axis=-1, keepdims=True)                      # [TB, 1]
    xc = h - mu
    var = jnp.mean(xc * xc, axis=-1, keepdims=True)
    h = xc * jax.lax.rsqrt(var + LN_EPS)
    h = h * vecs_ref[1:2, :] + vecs_ref[2:3, :]                   # gamma, beta

    # ReLU
    h = jnp.maximum(h, 0.0)

    # Linear 2: [TB, E] @ [E, E] -> [TB, E]
    out = jnp.dot(h, w2_ref[...], preferred_element_type=jnp.float32)
    out = out + vecs_ref[3:4, :]                                  # + b2

    out_ref[...] = out.astype(out_ref.dtype)                      # natural [B, E] tile


def _pick_block_b(B):
    """Batch tile width: <= 8192 rows, >= 2 grid steps once B > 256."""
    if B <= 256:
        return B                       # tiny problem: one step, no tiling overhead
    cap = min(8192, B // 2)            # at least 2 grid steps (pipeline + megacore)
    best = None
    for d in range(8, cap + 1, 8):     # sublane blocks must be multiples of 8
        if B % d == 0:
            best = d
    return best if best is not None else B


@functools.partial(jax.jit, static_argnames=("block_b",))
def lane_node_encoder(lane_vector, rotate_mat, params, block_b=None):
    B, D = lane_vector.shape
    E = params["w1"].shape[1]
    assert rotate_mat.shape == (B, D, D)

    if block_b is None:
        block_b = _pick_block_b(B)
    assert B % block_b == 0 and (block_b == B or block_b % 8 == 0)

    # Natural layouts only — no transposes anywhere (free contiguous reshape).
    rot_flat = rotate_mat.reshape(B, D * D)                       # [B, D*D]

    # Tiny constant operands (built once per jit trace, negligible bytes).
    rep = jnp.repeat(jnp.eye(D, dtype=jnp.float32), D, axis=1)    # [D, D*D]
    w1_tiled = jnp.tile(params["w1"].astype(jnp.float32), (D, 1)) # [D*D, E]
    vecs = jnp.stack(
        [params["b1"], params["gamma"], params["beta"], params["b2"]], axis=0
    ).astype(jnp.float32)                                         # [4, E]
    w2 = params["w2"].astype(jnp.float32)                         # [E, E]

    grid = (B // block_b,)
    const = lambda shape: pl.BlockSpec(shape, lambda i: (0,) * len(shape))

    flops = 2 * B * (D * D * D + D * D * E + E * E) + 10 * B * E
    bytes_accessed = 4 * (B * (D + D * D + E) + D * D * (D + E) + E * E + 4 * E)

    out = pl.pallas_call(
        lane_node_encoder_kernel,
        out_shape=jax.ShapeDtypeStruct((B, E), lane_vector.dtype),
        grid_spec=pltpu.PrefetchScalarGridSpec(
            num_scalar_prefetch=0,
            grid=grid,
            in_specs=[
                pl.BlockSpec((block_b, D), lambda i: (i, 0)),        # lane
                pl.BlockSpec((block_b, D * D), lambda i: (i, 0)),    # rot (flattened)
                const((D, D * D)),     # replication matrix (grid-invariant)
                const((D * D, E)),     # W1 tiled
                const((4, E)),         # b1 / gamma / beta / b2 packed
                const((E, E)),         # W2
            ],
            out_specs=pl.BlockSpec((block_b, E), lambda i: (i, 0)),
        ),
        compiler_params=pltpu.CompilerParams(
            # "parallel": independent batch tiles; lets the runtime shard grid
            # steps across v7x's two TensorCores and pipeline DMA/compute.
            dimension_semantics=("parallel",),
        ),
        cost_estimate=pl.CostEstimate(
            flops=flops, transcendentals=B, bytes_accessed=bytes_accessed
        ),
    )(lane_vector, rot_flat, rep, w1_tiled, vecs, w2)

    return out                                                     # [B, E], natural


def init_params(key, node_dim, embed_dim):
    k1, k2 = jax.random.split(key, 2)
    # Deterministic synthetic init (xavier-ish); LayerNorm gamma=1, beta=0.
    w1 = jax.random.normal(k1, (node_dim, embed_dim), jnp.float32) * (1.0 / jnp.sqrt(node_dim))
    b1 = jnp.zeros((embed_dim,), jnp.float32)
    gamma = jnp.ones((embed_dim,), jnp.float32)
    beta = jnp.zeros((embed_dim,), jnp.float32)
    w2 = jax.random.normal(k2, (embed_dim, embed_dim), jnp.float32) * (1.0 / jnp.sqrt(embed_dim))
    b2 = jnp.zeros((embed_dim,), jnp.float32)
    return {"w1": w1, "b1": b1, "gamma": gamma, "beta": beta, "w2": w2, "b2": b2}


def reference(lane_vector, rotate_mat, p):
    rotated = jnp.einsum("bd,bde->be", lane_vector, rotate_mat)
    h = rotated @ p["w1"] + p["b1"]
    mu = jnp.mean(h, axis=-1, keepdims=True)
    var = jnp.mean((h - mu) ** 2, axis=-1, keepdims=True)
    h = (h - mu) / jnp.sqrt(var + LN_EPS) * p["gamma"] + p["beta"]
    h = jnp.maximum(h, 0.0)
    return h @ p["w2"] + p["b2"]


if __name__ == "__main__":
    node_dim = 8
    embed_dim = 32
    batch = 512          # -> block_b = 256, grid = (2,): exercises the multi-step pipeline

    key = jax.random.PRNGKey(0)
    k_lane, k_rot, k_param = jax.random.split(key, 3)

    lane_vector = jax.random.normal(k_lane, (batch, node_dim), jnp.float32)
    rotate_mat = jax.random.normal(k_rot, (batch, node_dim, node_dim), jnp.float32)
    params = init_params(k_param, node_dim, embed_dim)

    out = lane_node_encoder(lane_vector, rotate_mat, params)
    out = jax.block_until_ready(out)

    ref = reference(lane_vector, rotate_mat, params)
    assert out.shape == (batch, embed_dim)
    assert jnp.allclose(out, ref, atol=1e-4, rtol=1e-4), "mismatch vs reference"

    print("KERNEL_OK")
</pallas_src>

<mosaic_0001>
module attributes {stable_mosaic.version = 11 : i64} {
  func.func @lane_node_encoder_kernel(%arg0: i32, %arg1: memref<256x8xf32, #tpu.memory_space<vmem>>, %arg2: memref<256x64xf32, #tpu.memory_space<vmem>>, %arg3: memref<8x64xf32, #tpu.memory_space<vmem>>, %arg4: memref<64x32xf32, #tpu.memory_space<vmem>>, %arg5: memref<4x32xf32, #tpu.memory_space<vmem>>, %arg6: memref<32x32xf32, #tpu.memory_space<vmem>>, %arg7: memref<256x32xf32, #tpu.memory_space<vmem>>) attributes {dimension_semantics = [#tpu.dimension_semantics<parallel>], iteration_bounds = array<i64: 2>, scalar_prefetch = 0 : i64, scratch_operands = 0 : i64, tpu.core_type = #tpu.core_type<tc>, window_params = [{transform_indices = @transform_0, window_bounds = array<i64: 256, 8>}, {transform_indices = @transform_1, window_bounds = array<i64: 256, 64>}, {pipeline_mode = #tpu.pipeline_mode<synchronous>, transform_indices = @transform_2, window_bounds = array<i64: 8, 64>}, {pipeline_mode = #tpu.pipeline_mode<synchronous>, transform_indices = @transform_3, window_bounds = array<i64: 64, 32>}, {pipeline_mode = #tpu.pipeline_mode<synchronous>, transform_indices = @transform_4, window_bounds = array<i64: 4, 32>}, {pipeline_mode = #tpu.pipeline_mode<synchronous>, transform_indices = @transform_5, window_bounds = array<i64: 32, 32>}, {transform_indices = @transform_6, window_bounds = array<i64: 256, 32>}]} {
    %c0 = arith.constant 0 : index
    %c0_0 = arith.constant 0 : index
    %0 = vector.load %arg1[%c0, %c0_0] : memref<256x8xf32, #tpu.memory_space<vmem>>, vector<256x8xf32>
    %c0_1 = arith.constant 0 : index
    %c0_2 = arith.constant 0 : index
    %1 = vector.load %arg2[%c0_1, %c0_2] : memref<256x64xf32, #tpu.memory_space<vmem>>, vector<256x64xf32>
    %c0_3 = arith.constant 0 : index
    %c0_4 = arith.constant 0 : index
    %2 = vector.load %arg3[%c0_3, %c0_4] : memref<8x64xf32, #tpu.memory_space<vmem>>, vector<8x64xf32>
    %cst = arith.constant dense<0.000000e+00> : vector<256x64xf32>
    %3 = tpu.matmul %0, %2, %cst {dimension_numbers = #tpu.dot_dimension_numbers<[1], [0], [0], [1], [0, 0, 1, 1], [], []>} : vector<256x8xf32>, vector<8x64xf32>, vector<256x64xf32> -> vector<256x64xf32>
    %4 = arith.mulf %3, %1 : vector<256x64xf32>
    %c0_5 = arith.constant 0 : index
    %c0_6 = arith.constant 0 : index
    %5 = vector.load %arg4[%c0_5, %c0_6] : memref<64x32xf32, #tpu.memory_space<vmem>>, vector<64x32xf32>
    %cst_7 = arith.constant dense<0.000000e+00> : vector<256x32xf32>
    %6 = tpu.matmul %4, %5, %cst_7 {dimension_numbers = #tpu.dot_dimension_numbers<[1], [0], [0], [1], [0, 0, 1, 1], [], []>} : vector<256x64xf32>, vector<64x32xf32>, vector<256x32xf32> -> vector<256x32xf32>
    %c0_8 = arith.constant 0 : index
    %c0_9 = arith.constant 0 : index
    %7 = vector.load %arg5[%c0_8, %c0_9] : memref<4x32xf32, #tpu.memory_space<vmem>>, vector<1x32xf32>
    %8 = vector.broadcast %7 : vector<1x32xf32> to vector<256x32xf32>
    %9 = arith.addf %6, %8 : vector<256x32xf32>
    %cst_10 = arith.constant dense<0.000000e+00> : vector<256xf32>
    %10 = vector.multi_reduction <add>, %9, %cst_10 [1] : vector<256x32xf32> to vector<256xf32>
    %11 = vector.shape_cast %10 : vector<256xf32> to vector<256x1xf32>
    %cst_11 = arith.constant 3.200000e+01 : f32
    %12 = vector.broadcast %cst_11 : f32 to vector<256x1xf32>
    %13 = arith.divf %11, %12 : vector<256x1xf32>
    %14 = vector.broadcast %13 : vector<256x1xf32> to vector<256x32xf32>
    %15 = arith.subf %9, %14 : vector<256x32xf32>
    %16 = arith.mulf %15, %15 : vector<256x32xf32>
    %cst_12 = arith.constant dense<0.000000e+00> : vector<256xf32>
    %17 = vector.multi_reduction <add>, %16, %cst_12 [1] : vector<256x32xf32> to vector<256xf32>
    %18 = vector.shape_cast %17 : vector<256xf32> to vector<256x1xf32>
    %cst_13 = arith.constant 3.200000e+01 : f32
    %19 = vector.broadcast %cst_13 : f32 to vector<256x1xf32>
    %20 = arith.divf %18, %19 : vector<256x1xf32>
    %cst_14 = arith.constant 9.99999974E-6 : f32
    %21 = vector.broadcast %cst_14 : f32 to vector<256x1xf32>
    %22 = arith.addf %20, %21 : vector<256x1xf32>
    %23 = math.rsqrt %22 : vector<256x1xf32>
    %24 = vector.broadcast %23 : vector<256x1xf32> to vector<256x32xf32>
    %25 = arith.mulf %15, %24 : vector<256x32xf32>
    %c1 = arith.constant 1 : index
    %c0_15 = arith.constant 0 : index
    %26 = vector.load %arg5[%c1, %c0_15] : memref<4x32xf32, #tpu.memory_space<vmem>>, vector<1x32xf32>
    %27 = vector.broadcast %26 : vector<1x32xf32> to vector<256x32xf32>
    %28 = arith.mulf %25, %27 : vector<256x32xf32>
    %c2 = arith.constant 2 : index
    %c0_16 = arith.constant 0 : index
    %29 = vector.load %arg5[%c2, %c0_16] : memref<4x32xf32, #tpu.memory_space<vmem>>, vector<1x32xf32>
    %30 = vector.broadcast %29 : vector<1x32xf32> to vector<256x32xf32>
    %31 = arith.addf %28, %30 : vector<256x32xf32>
    %cst_17 = arith.constant 0.000000e+00 : f32
    %32 = vector.broadcast %cst_17 : f32 to vector<256x32xf32>
    %33 = arith.maximumf %31, %32 : vector<256x32xf32>
    %c0_18 = arith.constant 0 : index
    %c0_19 = arith.constant 0 : index
    %34 = vector.load %arg6[%c0_18, %c0_19] : memref<32x32xf32, #tpu.memory_space<vmem>>, vector<32x32xf32>
    %cst_20 = arith.constant dense<0.000000e+00> : vector<256x32xf32>
    %35 = tpu.matmul %33, %34, %cst_20 {dimension_numbers = #tpu.dot_dimension_numbers<[1], [0], [0], [1], [0, 0, 1, 1], [], []>} : vector<256x32xf32>, vector<32x32xf32>, vector<256x32xf32> -> vector<256x32xf32>
    %c3 = arith.constant 3 : index
    %c0_21 = arith.constant 0 : index
    %36 = vector.load %arg5[%c3, %c0_21] : memref<4x32xf32, #tpu.memory_space<vmem>>, vector<1x32xf32>
    %37 = vector.broadcast %36 : vector<1x32xf32> to vector<256x32xf32>
    %38 = arith.addf %35, %37 : vector<256x32xf32>
    %c0_22 = arith.constant 0 : index
    %c0_23 = arith.constant 0 : index
    %39 = vector.load %arg7[%c0_22, %c0_23] : memref<256x32xf32, #tpu.memory_space<vmem>>, vector<256x32xf32>
    tpu.vector_store %arg7[%c0_22, %c0_23], %38 {strides = array<i32>} : memref<256x32xf32, #tpu.memory_space<vmem>>, vector<256x32xf32>,
    return
  }
  func.func @transform_0(%arg0: i32) -> (i32, i32) {
    %c0_i32 = arith.constant 0 : i32
    %c0_i32_0 = arith.constant 0 : i32
    return %arg0, %c0_i32 : i32, i32
  }
  func.func @transform_1(%arg0: i32) -> (i32, i32) {
    %c0_i32 = arith.constant 0 : i32
    %c0_i32_0 = arith.constant 0 : i32
    return %arg0, %c0_i32 : i32, i32
  }
  func.func @transform_2(%arg0: i32) -> (i32, i32) {
    %c0_i32 = arith.constant 0 : i32
    %c0_i32_0 = arith.constant 0 : i32
    %c0_i32_1 = arith.constant 0 : i32
    return %c0_i32, %c0_i32_0 : i32, i32
  }
  func.func @transform_3(%arg0: i32) -> (i32, i32) {
    %c0_i32 = arith.constant 0 : i32
    %c0_i32_0 = arith.constant 0 : i32
    %c0_i32_1 = arith.constant 0 : i32
    return %c0_i32, %c0_i32_0 : i32, i32
  }
  func.func @transform_4(%arg0: i32) -> (i32, i32) {
    %c0_i32 = arith.constant 0 : i32
    %c0_i32_0 = arith.constant 0 : i32
    %c0_i32_1 = arith.constant 0 : i32
    return %c0_i32, %c0_i32_0 : i32, i32
  }
  func.func @transform_5(%arg0: i32) -> (i32, i32) {
    %c0_i32 = arith.constant 0 : i32
    %c0_i32_0 = arith.constant 0 : i32
    %c0_i32_1 = arith.constant 0 : i32
    return %c0_i32, %c0_i32_0 : i32, i32
  }
  func.func @transform_6(%arg0: i32) -> (i32, i32) {
    %c0_i32 = arith.constant 0 : i32
    %c0_i32_0 = arith.constant 0 : i32
    return %arg0, %c0_i32 : i32, i32
  }
}

</mosaic_0001>

<llo_original>
// kernel: lane_node_encoder.1
$region0: #{lane_node_encoder.1}
  #allocation0 [shape = 'u32[]', space=smem, size = 0x4, offset = 0x4, fixed_abs, tag = 'smem constant byte address 0x4 - core index']
  #allocation1 [shape = 'u32[144,128]{1,0:T(1,128)}', space=vmem, size = 0x12000, scoped, tag = 'internal scratch']
  %s0 = inlined_call_operand.vmem [shape: f32[512,8], index: 0, kind: input, shape index: {}]
  %s1 = inlined_call_operand.vmem [shape: f32[512,64], index: 1, kind: input, shape index: {}]
  %s2 = inlined_call_operand.vmem [shape: f32[8,64], index: 2, kind: input, shape index: {}]
  %s3 = inlined_call_operand.vmem [shape: f32[64,32], index: 3, kind: input, shape index: {}]
  %s4 = inlined_call_operand.vmem [shape: f32[4,32], index: 4, kind: input, shape index: {}]
  %s5 = inlined_call_operand.vmem [shape: f32[32,32], index: 5, kind: input, shape index: {}]
  %s6 = inlined_call_operand.vmem [shape: f32[512,32], index: 6, kind: output, shape index: {}]
  %s7 = sld [smem:[#allocation0]]
  $region57: #{lane_node_encoder.1} parent=0
    _
  %s9 = ssub.s32 1, %s7
  %s10 = scalar_select 0, %s9, %s7
  loop: start=0, step=1, limit=4
  $region2: #{lane_node_encoder.1} parent=0 // loop_pre_header
    _
  $region3: #{lane_node_encoder.1} parent=0 // loop_header
    %s12 = sphi 0, %s16
    %p13 = scmp.ge.s32.totalorder %s12, 4
    %s22 = sphi 0, %s24
    %s25 = sphi 0, %s22
    %s26 = sphi 0, %s25
    %s42 = sphi 0, %s26
    %s48 = sphi 0, %s50
    %s51 = sphi 0, %s48
    %s52 = sphi 0, %s51
    %s68 = sphi 0, %s52
    %s72 = sphi 0, %s72
    %s74 = sphi 0, %s72
    %s75 = sphi 0, %s74
    %s89 = sphi 0, %s75
    %s93 = sphi 0, %s93
    %s95 = sphi 0, %s93
    %s96 = sphi 0, %s95
    %s110 = sphi 0, %s96
    %s114 = sphi 0, %s114
    %s116 = sphi 0, %s114
    %s117 = sphi 0, %s116
    %s131 = sphi 0, %s117
    %s135 = sphi 0, %s135
    %s137 = sphi 0, %s135
    %s138 = sphi 0, %s137
    %s152 = sphi 0, %s138
    %s158 = sphi 0, %s160
    %s161 = sphi 0, %s158
    %s162 = sphi 0, %s161
    %s178 = sphi 0, %s162
  $region4: #{lane_node_encoder.1} parent=0 // loop_header_branch
    %15 = sbr.rel (%p13) target = $region8
  $region5: #{lane_node_encoder.1} parent=0 // loop_body
    %s17 = ssub.s32 %s12, 1
    %s18 = ssub.s32 %s12, 2
    %s19 = sadd.s32 %s12, 1
    %s20 = ssub.s32 %s12, %s19
    %p21 = scmp.eq.s32.totalorder %s20, 0
    %s23 = sadd.s32 %s22, 1
    %s24 = scalar_select %p21, %s22, %s23
    %p27 = pneg %p21
    %p28 = scmp.eq.s32.totalorder %s12, 1
    %p29 = por %p27, %p28
    %p30 = scmp.ne.s32.totalorder %s22, %s25
    %p31 = scmp.eq.s32.totalorder %s12, 0
    %p32 = por %p30, %p31
    %p33 = scmp.ne.s32.totalorder %s22, %s25
    %p34 = scmp.eq.s32.totalorder %s17, 1
    %p35 = por %p33, %p34
    %p36 = scmp.ne.s32.totalorder %s25, %s26
    %p37 = scmp.eq.s32.totalorder %s17, 0
    %p38 = por %p36, %p37
    %p39 = scmp.ne.s32.totalorder %s25, %s26
    %p40 = scmp.eq.s32.totalorder %s18, 1
    %p41 = por %p39, %p40
    %p43 = scmp.ne.s32.totalorder %s26, %s42
    %p44 = scmp.eq.s32.totalorder %s18, 0
    %p45 = por %p43, %p44
    %s46 = ssub.s32 %s12, %s19
    %p47 = scmp.eq.s32.totalorder %s46, 0
    %s49 = sadd.s32 %s48, 1
    %s50 = scalar_select %p47, %s48, %s49
    %p53 = pneg %p47
    %p54 = scmp.eq.s32.totalorder %s12, 1
    %p55 = por %p53, %p54
    %p56 = scmp.ne.s32.totalorder %s48, %s51
    %p57 = scmp.eq.s32.totalorder %s12, 0
    %p58 = por %p56, %p57
    %p59 = scmp.ne.s32.totalorder %s48, %s51
    %p60 = scmp.eq.s32.totalorder %s17, 1
    %p61 = por %p59, %p60
    %p62 = scmp.ne.s32.totalorder %s51, %s52
    %p63 = scmp.eq.s32.totalorder %s17, 0
    %p64 = por %p62, %p63
    %p65 = scmp.ne.s32.totalorder %s51, %s52
    %p66 = scmp.eq.s32.totalorder %s18, 1
    %p67 = por %p65, %p66
    %p69 = scmp.ne.s32.totalorder %s52, %s68
    %p70 = scmp.eq.s32.totalorder %s18, 0
    %p71 = por %p69, %p70
    %s73 = sadd.s32 %s72, 1
    %p76 = scmp.eq.s32.totalorder %s12, 1
    %p77 = scmp.ne.s32.totalorder %s72, %s74
    %p78 = scmp.eq.s32.totalorder %s12, 0
    %p79 = por %p77, %p78
    %p80 = scmp.ne.s32.totalorder %s72, %s74
    %p81 = scmp.eq.s32.totalorder %s17, 1
    %p82 = por %p80, %p81
    %p83 = scmp.ne.s32.totalorder %s74, %s75
    %p84 = scmp.eq.s32.totalorder %s17, 0
    %p85 = por %p83, %p84
    %p86 = scmp.ne.s32.totalorder %s74, %s75
    %p87 = scmp.eq.s32.totalorder %s18, 1
    %p88 = por %p86, %p87
    %p90 = scmp.ne.s32.totalorder %s75, %s89
    %p91 = scmp.eq.s32.totalorder %s18, 0
    %p92 = por %p90, %p91
    %s94 = sadd.s32 %s93, 1
    %p97 = scmp.eq.s32.totalorder %s12, 1
    %p98 = scmp.ne.s32.totalorder %s93, %s95
    %p99 = scmp.eq.s32.totalorder %s12, 0
    %p100 = por %p98, %p99
    %p101 = scmp.ne.s32.totalorder %s93, %s95
    %p102 = scmp.eq.s32.totalorder %s17, 1
    %p103 = por %p101, %p102
    %p104 = scmp.ne.s32.totalorder %s95, %s96
    %p105 = scmp.eq.s32.totalorder %s17, 0
    %p106 = por %p104, %p105
    %p107 = scmp.ne.s32.totalorder %s95, %s96
    %p108 = scmp.eq.s32.totalorder %s18, 1
    %p109 = por %p107, %p108
    %p111 = scmp.ne.s32.totalorder %s96, %s110
    %p112 = scmp.eq.s32.totalorder %s18, 0
    %p113 = por %p111, %p112
    %s115 = sadd.s32 %s114, 1
    %p118 = scmp.eq.s32.totalorder %s12, 1
    %p119 = scmp.ne.s32.totalorder %s114, %s116
    %p120 = scmp.eq.s32.totalorder %s12, 0
    %p121 = por %p119, %p120
    %p122 = scmp.ne.s32.totalorder %s114, %s116
    %p123 = scmp.eq.s32.totalorder %s17, 1
    %p124 = por %p122, %p123
    %p125 = scmp.ne.s32.totalorder %s116, %s117
    %p126 = scmp.eq.s32.totalorder %s17, 0
    %p127 = por %p125, %p126
    %p128 = scmp.ne.s32.totalorder %s116, %s117
    %p129 = scmp.eq.s32.totalorder %s18, 1
    %p130 = por %p128, %p129
    %p132 = scmp.ne.s32.totalorder %s117, %s131
    %p133 = scmp.eq.s32.totalorder %s18, 0
    %p134 = por %p132, %p133
    %s136 = sadd.s32 %s135, 1
    %p139 = scmp.eq.s32.totalorder %s12, 1
    %p140 = scmp.ne.s32.totalorder %s135, %s137
    %p141 = scmp.eq.s32.totalorder %s12, 0
    %p142 = por %p140, %p141
    %p143 = scmp.ne.s32.totalorder %s135, %s137
    %p144 = scmp.eq.s32.totalorder %s17, 1
    %p145 = por %p143, %p144
    %p146 = scmp.ne.s32.totalorder %s137, %s138
    %p147 = scmp.eq.s32.totalorder %s17, 0
    %p148 = por %p146, %p147
    %p149 = scmp.ne.s32.totalorder %s137, %s138
    %p150 = scmp.eq.s32.totalorder %s18, 1
    %p151 = por %p149, %p150
    %p153 = scmp.ne.s32.totalorder %s138, %s152
    %p154 = scmp.eq.s32.totalorder %s18, 0
    %p155 = por %p153, %p154
    %s156 = ssub.s32 %s12, %s19
    %p157 = scmp.eq.s32.totalorder %s156, 0
    %s159 = sadd.s32 %s158, 1
    %s160 = scalar_select %p157, %s158, %s159
    %p163 = pneg %p157
    %p164 = scmp.eq.s32.totalorder %s12, 1
    %p165 = por %p163, %p164
    %p166 = scmp.ne.s32.totalorder %s158, %s161
    %p167 = scmp.eq.s32.totalorder %s12, 0
    %p168 = por %p166, %p167
    %p169 = scmp.ne.s32.totalorder %s158, %s161
    %p170 = scmp.eq.s32.totalorder %s17, 1
    %p171 = por %p169, %p170
    %p172 = scmp.ne.s32.totalorder %s161, %s162
    %p173 = scmp.eq.s32.totalorder %s17, 0
    %p174 = por %p172, %p173
    %p175 = scmp.ne.s32.totalorder %s161, %s162
    %p176 = scmp.eq.s32.totalorder %s18, 1
    %p177 = por %p175, %p176
    %p179 = scmp.ne.s32.totalorder %s162, %s178
    %p180 = scmp.eq.s32.totalorder %s18, 0
    %p181 = por %p179, %p180
    %p182 = scmp.le.s32.totalorder 1, %s12
    %p183 = scmp.lt.s32.totalorder %s12, 3
    %p184 = pnand %p182, %p183
    %p185 = pneg %p184
    // Predicated region
    $region9: #{lane_node_encoder.1} parent=5 // pred_check
      _
    $region10: #{lane_node_encoder.1} parent=5 // pred_check_branch
      %187 = sbr.rel (%p184) target = $region12
    $region11: #{lane_node_encoder.1} parent=5 // pred_region
      %s188 = ssub.s32 %s12, 1
      // Predicated region
      $region13: #{lane_node_encoder.1} parent=11 // pred_check
        %p189 = pneg %p85
      $region14: #{lane_node_encoder.1} parent=11 // pred_check_branch
        %191 = sbr.rel (%p189) target = $region16
      $region15: #{lane_node_encoder.1} parent=11 // pred_region
        _
      $region16: #{lane_node_encoder.1} parent=11 // pred_fallthru
        _
      // Predicated region
      $region17: #{lane_node_encoder.1} parent=11 // pred_check
        %p192 = pneg %p106
      $region18: #{lane_node_encoder.1} parent=11 // pred_check_branch
        %194 = sbr.rel (%p192) target = $region20
      $region19: #{lane_node_encoder.1} parent=11 // pred_region
        _
      $region20: #{lane_node_encoder.1} parent=11 // pred_fallthru
        _
      // Predicated region
      $region21: #{lane_node_encoder.1} parent=11 // pred_check
        %p195 = pneg %p127
      $region22: #{lane_node_encoder.1} parent=11 // pred_check_branch
        %197 = sbr.rel (%p195) target = $region24
      $region23: #{lane_node_encoder.1} parent=11 // pred_region
        _
      $region24: #{lane_node_encoder.1} parent=11 // pred_fallthru
        _
      // Predicated region
      $region25: #{lane_node_encoder.1} parent=11 // pred_check
        %p198 = pneg %p148
      $region26: #{lane_node_encoder.1} parent=11 // pred_check_branch
        %200 = sbr.rel (%p198) target = $region28
      $region27: #{lane_node_encoder.1} parent=11 // pred_region
        _
      $region28: #{lane_node_encoder.1} parent=11 // pred_fallthru
        _
    $region12: #{lane_node_encoder.1} parent=5 // pred_fallthru
      _
    %p201 = scmp.lt.s32.totalorder %s12, 2
    // Predicated region
    $region29: #{lane_node_encoder.1} parent=5 // pred_check
      %p202 = pneg %p201
    $region30: #{lane_node_encoder.1} parent=5 // pred_check_branch
      %204 = sbr.rel (%p202) target = $region32
    $region31: #{lane_node_encoder.1} parent=5 // pred_region
      // Predicated region
      $region33: #{lane_node_encoder.1} parent=31 // pred_check
        %p205 = pneg %p32
      $region34: #{lane_node_encoder.1} parent=31 // pred_check_branch
        %207 = sbr.rel (%p205) target = $region36
      $region35: #{lane_node_encoder.1} parent=31 // pred_region
        %s208 = smul.u32 32, %s12
        %p209 = scmp.lt.s32.totalorder %s208, 63
        %s210 = scalar_select %p209, %s208, 63
        %s211 = smul.addr %s210, 8
        %s212 = scalar_lea.vmem %s0, %s211
        %s213 = smul.u32 32, %s12
      $region36: #{lane_node_encoder.1} parent=31 // pred_fallthru
        _
      // Predicated region
      $region37: #{lane_node_encoder.1} parent=31 // pred_check
        %p214 = pneg %p58
      $region38: #{lane_node_encoder.1} parent=31 // pred_check_branch
        %216 = sbr.rel (%p214) target = $region40
      $region39: #{lane_node_encoder.1} parent=31 // pred_region
        %s217 = smul.u32 32, %s12
        %p218 = scmp.lt.s32.totalorder %s217, 63
        %s219 = scalar_select %p218, %s217, 63
        %s220 = smul.addr %s219, 8
        %s221 = scalar_lea.vmem %s1, %s220
        %s222 = smul.u32 32, %s12
      $region40: #{lane_node_encoder.1} parent=31 // pred_fallthru
        _
    $region32: #{lane_node_encoder.1} parent=5 // pred_fallthru
      _
    %p223 = scmp.le.s32.totalorder 1, %s12
    %p224 = scmp.lt.s32.totalorder %s12, 3
    %p225 = pnand %p223, %p224
    %p226 = pneg %p225
    // Predicated region
    $region41: #{lane_node_encoder.1} parent=5 // pred_check
      _
    $region42: #{lane_node_encoder.1} parent=5 // pred_check_branch
      %228 = sbr.rel (%p225) target = $region44
    $region43: #{lane_node_encoder.1} parent=5 // pred_region
      %s229 = ssub.s32 %s12, 1
      %s230 = smul.u32 32, %s17
      %p231 = scmp.lt.s32.totalorder %s230, 63
      %s232 = scalar_select %p231, %s230, 63
      %s233 = smul.addr %s232, 8
      %s234 = scalar_lea.vmem %s0, %s233
      %p235 = pneg %p38
      %p236 = pneg %p35
      %s237 = smul.u32 32, %s17
      %p238 = scmp.lt.s32.totalorder %s237, 63
      %s239 = scalar_select %p238, %s237, 63
      %s240 = smul.addr %s239, 8
      %s241 = scalar_lea.vmem %s1, %s240
      %p242 = pneg %p64
      %p243 = pneg %p61
      %p244 = pneg %p85
      %p245 = pneg %p82
      %p246 = pneg %p106
      %p247 = pneg %p103
      %p248 = pneg %p127
      %p249 = pneg %p124
      %p250 = pneg %p148
      %p251 = pneg %p145
      %p252 = pneg %p174
      %p253 = pneg %p171
      %s254 = smul.u32 32, %s17
      %p255 = scmp.lt.s32.totalorder %s254, 63
      %s256 = scalar_select %p255, %s254, 63
      %s257 = smul.addr %s256, 8
      %s258 = scalar_lea.vmem %s6, %s257
      %s259 = smul.u32 32, %s17
      %p260 = scmp.lt.s32.totalorder %s259, 63
      %s261 = scalar_select %p260, %s259, 63
      %s262 = smul.addr %s261, 8
      %s263 = scalar_lea.vmem %s0, %s262
      %s264 = smul.u32 32, %s17
      %s265 = smul.u32 32, %s17
      %p266 = scmp.lt.s32.totalorder %s265, 63
      %s267 = scalar_select %p266, %s265, 63
      %s268 = smul.addr %s267, 8
      %s269 = scalar_lea.vmem %s1, %s268
      %s270 = smul.u32 32, %s17
      %s271 = smul.u32 32, %s17
      %p272 = scmp.lt.s32.totalorder %s271, 63
      %s273 = scalar_select %p272, %s271, 63
      %s274 = smul.addr %s273, 8
      %s275 = scalar_lea.vmem %s6, %s274
      %s276 = smul.u32 32, %s17
      %v277 = vld [vmem:[%s263] sm:$0xff]
      %v278 = vld [vmem:[%s263 + $0x8] sm:$0xff]
      %v279 = vld [vmem:[%s263 + $0x10] sm:$0xff]
      %v280 = vld [vmem:[%s263 + $0x18] sm:$0xff]
      %v281 = vld [vmem:[%s263 + $0x20] sm:$0xff]
      %v282 = vld [vmem:[%s263 + $0x28] sm:$0xff]
      %v283 = vld [vmem:[%s263 + $0x30] sm:$0xff]
      %v284 = vld [vmem:[%s263 + $0x38] sm:$0xff]
      %v285 = vld [vmem:[%s263 + $0x40] sm:$0xff]
      %v286 = vld [vmem:[%s263 + $0x48] sm:$0xff]
      %v287 = vld [vmem:[%s263 + $0x50] sm:$0xff]
      %v288 = vld [vmem:[%s263 + $0x58] sm:$0xff]
      %v289 = vld [vmem:[%s263 + $0x60] sm:$0xff]
      %v290 = vld [vmem:[%s263 + $0x68] sm:$0xff]
      %v291 = vld [vmem:[%s263 + $0x70] sm:$0xff]
      %v292 = vld [vmem:[%s263 + $0x78] sm:$0xff]
      %v293 = vld [vmem:[%s263 + $0x80] sm:$0xff]
      %v294 = vld [vmem:[%s263 + $0x88] sm:$0xff]
      %v295 = vld [vmem:[%s263 + $0x90] sm:$0xff]
      %v296 = vld [vmem:[%s263 + $0x98] sm:$0xff]
      %v297 = vld [vmem:[%s263 + $0xa0] sm:$0xff]
      %v298 = vld [vmem:[%s263 + $0xa8] sm:$0xff]
      %v299 = vld [vmem:[%s263 + $0xb0] sm:$0xff]
      %v300 = vld [vmem:[%s263 + $0xb8] sm:$0xff]
      %v301 = vld [vmem:[%s263 + $0xc0] sm:$0xff]
      %v302 = vld [vmem:[%s263 + $0xc8] sm:$0xff]
      %v303 = vld [vmem:[%s263 + $0xd0] sm:$0xff]
      %v304 = vld [vmem:[%s263 + $0xd8] sm:$0xff]
      %v305 = vld [vmem:[%s263 + $0xe0] sm:$0xff]
      %v306 = vld [vmem:[%s263 + $0xe8] sm:$0xff]
      %v307 = vld [vmem:[%s263 + $0xf0] sm:$0xff]
      %v308 = vld [vmem:[%s263 + $0xf8] sm:$0xff]
      %v309 = vld [vmem:[%s269] sm:$0xff]
      %v310 = vld [vmem:[%s269 + $0x8] sm:$0xff]
      %v311 = vld [vmem:[%s269 + $0x10] sm:$0xff]
      %v312 = vld [vmem:[%s269 + $0x18] sm:$0xff]
      %v313 = vld [vmem:[%s269 + $0x20] sm:$0xff]
      %v314 = vld [vmem:[%s269 + $0x28] sm:$0xff]
      %v315 = vld [vmem:[%s269 + $0x30] sm:$0xff]
      %v316 = vld [vmem:[%s269 + $0x38] sm:$0xff]
      %v317 = vld [vmem:[%s269 + $0x40] sm:$0xff]
      %v318 = vld [vmem:[%s269 + $0x48] sm:$0xff]
      %v319 = vld [vmem:[%s269 + $0x50] sm:$0xff]
      %v320 = vld [vmem:[%s269 + $0x58] sm:$0xff]
      %v321 = vld [vmem:[%s269 + $0x60] sm:$0xff]
      %v322 = vld [vmem:[%s269 + $0x68] sm:$0xff]
      %v323 = vld [vmem:[%s269 + $0x70] sm:$0xff]
      %v324 = vld [vmem:[%s269 + $0x78] sm:$0xff]
      %v325 = vld [vmem:[%s269 + $0x80] sm:$0xff]
      %v326 = vld [vmem:[%s269 + $0x88] sm:$0xff]
      %v327 = vld [vmem:[%s269 + $0x90] sm:$0xff]
      %v328 = vld [vmem:[%s269 + $0x98] sm:$0xff]
      %v329 = vld [vmem:[%s269 + $0xa0] sm:$0xff]
      %v330 = vld [vmem:[%s269 + $0xa8] sm:$0xff]
      %v331 = vld [vmem:[%s269 + $0xb0] sm:$0xff]
      %v332 = vld [vmem:[%s269 + $0xb8] sm:$0xff]
      %v333 = vld [vmem:[%s269 + $0xc0] sm:$0xff]
      %v334 = vld [vmem:[%s269 + $0xc8] sm:$0xff]
      %v335 = vld [vmem:[%s269 + $0xd0] sm:$0xff]
      %v336 = vld [vmem:[%s269 + $0xd8] sm:$0xff]
      %v337 = vld [vmem:[%s269 + $0xe0] sm:$0xff]
      %v338 = vld [vmem:[%s269 + $0xe8] sm:$0xff]
      %v339 = vld [vmem:[%s269 + $0xf0] sm:$0xff]
      %v340 = vld [vmem:[%s269 + $0xf8] sm:$0xff]
      %v341 = vld [vmem:[%s2] sm:$0xff]
      %vm342 = vcmask 64512
      %v344 = vsel %vm342, %v277, 0
      %v347 = vsel %vm342, %v278, 0
      %v350 = vsel %vm342, %v279, 0
      %v353 = vsel %vm342, %v280, 0
      %v356 = vsel %vm342, %v281, 0
      %v359 = vsel %vm342, %v282, 0
      %v362 = vsel %vm342, %v283, 0
      %v365 = vsel %vm342, %v284, 0
      %v368 = vsel %vm342, %v285, 0
      %v371 = vsel %vm342, %v286, 0
      %v374 = vsel %vm342, %v287, 0
      %v377 = vsel %vm342, %v288, 0
      %v380 = vsel %vm342, %v289, 0
      %v383 = vsel %vm342, %v290, 0
      %v386 = vsel %vm342, %v291, 0
      %v389 = vsel %vm342, %v292, 0
      %v392 = vsel %vm342, %v293, 0
      %v395 = vsel %vm342, %v294, 0
      %v398 = vsel %vm342, %v295, 0
      %v401 = vsel %vm342, %v296, 0
      %v404 = vsel %vm342, %v297, 0
      %v407 = vsel %vm342, %v298, 0
      %v410 = vsel %vm342, %v299, 0
      %v413 = vsel %vm342, %v300, 0
      %v416 = vsel %vm342, %v301, 0
      %v419 = vsel %vm342, %v302, 0
      %v422 = vsel %vm342, %v303, 0
      %v425 = vsel %vm342, %v304, 0
      %v428 = vsel %vm342, %v305, 0
      %v431 = vsel %vm342, %v306, 0
      %v434 = vsel %vm342, %v307, 0
      %v437 = vsel %vm342, %v308, 0
      %439 = vmatprep.subr.mxu0 0.0
      %440 = vmatpush1.msra.mxu0 0.0
      %441 = vmatprep.subr.mxu0 0.0
      %442 = vmatpush1.msra.mxu0 0.0
      %443 = vmatprep.subr.mxu0 0.0
      %444 = vmatpush1.msra.mxu0 0.0
      %445 = vmatprep.subr.mxu0 0.0
      %446 = vmatpush1.msra.mxu0 0.0
      %447 = vmatprep.subr.mxu0 0.0
      %448 = vmatpush1.msra.mxu0 0.0
      %449 = vmatprep.subr.mxu0 0.0
      %450 = vmatpush1.msra.mxu0 0.0
      %451 = vmatprep.subr.mxu0 0.0
      %452 = vmatpush1.msra.mxu0 0.0
      %453 = vmatprep.subr.mxu0 0.0
      %454 = vmatpush1.msra.mxu0 0.0
      %455 = vmatprep.subr.mxu0 0.0
      %456 = vmatpush1.msra.mxu0 0.0
      %457 = vmatprep.subr.mxu0 0.0
      %458 = vmatpush1.msra.mxu0 0.0
      %459 = vmatprep.subr.mxu0 0.0
      %460 = vmatpush1.msra.mxu0 0.0
      %461 = vmatprep.subr.mxu0 0.0
      %462 = vmatpush1.msra.mxu0 0.0
      %463 = vmatprep.subr.mxu0 0.0
      %464 = vmatpush1.msra.mxu0 0.0
      %465 = vmatprep.subr.mxu0 0.0
      %466 = vmatpush1.msra.mxu0 0.0
      %467 = vmatprep.subr.mxu0 0.0
      %468 = vmatpush1.msra.mxu0 0.0
      %469 = vmatprep.subr.mxu0 0.0
      %470 = vmatpush1.msra.mxu0 %v341
      %471 = vmatprep.subr.mxu0 0.0
      %472 = vmatpush2.msra.mxu0 0.0
      %473 = vmatprep.subr.mxu0 0.0
      %474 = vmatpush2.msra.mxu0 0.0
      %475 = vmatprep.subr.mxu0 0.0
      %476 = vmatpush2.msra.mxu0 0.0
      %477 = vmatprep.subr.mxu0 0.0
      %478 = vmatpush2.msra.mxu0 0.0
      %479 = vmatprep.subr.mxu0 0.0
      %480 = vmatpush2.msra.mxu0 0.0
      %481 = vmatprep.subr.mxu0 0.0
      %482 = vmatpush2.msra.mxu0 0.0
      %483 = vmatprep.subr.mxu0 0.0
      %484 = vmatpush2.msra.mxu0 0.0
      %485 = vmatprep.subr.mxu0 0.0
      %486 = vmatpush2.msra.mxu0 0.0
      %487 = vmatprep.subr.mxu0 0.0
      %488 = vmatpush2.msra.mxu0 0.0
      %489 = vmatprep.subr.mxu0 0.0
      %490 = vmatpush2.msra.mxu0 0.0
      %491 = vmatprep.subr.mxu0 0.0
      %492 = vmatpush2.msra.mxu0 0.0
      %493 = vmatprep.subr.mxu0 0.0
      %494 = vmatpush2.msra.mxu0 0.0
      %495 = vmatprep.subr.mxu0 0.0
      %496 = vmatpush2.msra.mxu0 0.0
      %497 = vmatprep.subr.mxu0 0.0
      %498 = vmatpush2.msra.mxu0 0.0
      %499 = vmatprep.subr.mxu0 0.0
      %500 = vmatpush2.msra.mxu0 0.0
      %501 = vmatprep.subr.mxu0 0.0
      %502 = vmatpush2.msra.mxu0 0.0
      %503 = vmatprep.mubr.f32.mxu0 0.0
      %504 = vmatmul.mubr.f32.gmra.mxu0 %v344
      %v505 = vpop.f32.mrf.mxu0
      %v506 = vadd.f32 0.0, %v505
      %v507 = vpop.f32.mrf.mxu0
      %508 = vmatprep.mubr.f32.mxu0 0.0
      %509 = vmatmul.mubr.f32.gmra.mxu0 %v347
      %v510 = vpop.f32.mrf.mxu0
      %v511 = vadd.f32 0.0, %v510
      %v512 = vpop.f32.mrf.mxu0
      %513 = vmatprep.mubr.f32.mxu0 0.0
      %514 = vmatmul.mubr.f32.gmra.mxu0 %v350
      %v515 = vpop.f32.mrf.mxu0
      %v516 = vadd.f32 0.0, %v515
      %v517 = vpop.f32.mrf.mxu0
      %518 = vmatprep.mubr.f32.mxu0 0.0
      %519 = vmatmul.mubr.f32.gmra.mxu0 %v353
      %v520 = vpop.f32.mrf.mxu0
      %v521 = vadd.f32 0.0, %v520
      %v522 = vpop.f32.mrf.mxu0
      %523 = vmatprep.mubr.f32.mxu0 0.0
      %524 = vmatmul.mubr.f32.gmra.mxu0 %v356
      %v525 = vpop.f32.mrf.mxu0
      %v526 = vadd.f32 0.0, %v525
      %v527 = vpop.f32.mrf.mxu0
      %528 = vmatprep.mubr.f32.mxu0 0.0
      %529 = vmatmul.mubr.f32.gmra.mxu0 %v359
      %v530 = vpop.f32.mrf.mxu0
      %v531 = vadd.f32 0.0, %v530
      %v532 = vpop.f32.mrf.mxu0
      %533 = vmatprep.mubr.f32.mxu0 0.0
      %534 = vmatmul.mubr.f32.gmra.mxu0 %v362
      %v535 = vpop.f32.mrf.mxu0
      %v536 = vadd.f32 0.0, %v535
      %v537 = vpop.f32.mrf.mxu0
      %538 = vmatprep.mubr.f32.mxu0 0.0
      %539 = vmatmul.mubr.f32.gmra.mxu0 %v365
      %v540 = vpop.f32.mrf.mxu0
      %v541 = vadd.f32 0.0, %v540
      %v542 = vpop.f32.mrf.mxu0
      %543 = vmatprep.mubr.f32.mxu0 0.0
      %544 = vmatmul.mubr.f32.gmra.mxu0 %v368
      %v545 = vpop.f32.mrf.mxu0
      %v546 = vadd.f32 0.0, %v545
      %v547 = vpop.f32.mrf.mxu0
      %548 = vmatprep.mubr.f32.mxu0 0.0
      %549 = vmatmul.mubr.f32.gmra.mxu0 %v371
      %v550 = vpop.f32.mrf.mxu0
      %v551 = vadd.f32 0.0, %v550
      %v552 = vpop.f32.mrf.mxu0
      %553 = vmatprep.mubr.f32.mxu0 0.0
      %554 = vmatmul.mubr.f32.gmra.mxu0 %v374
      %v555 = vpop.f32.mrf.mxu0
      %v556 = vadd.f32 0.0, %v555
      %v557 = vpop.f32.mrf.mxu0
      %558 = vmatprep.mubr.f32.mxu0 0.0
      %559 = vmatmul.mubr.f32.gmra.mxu0 %v377
      %v560 = vpop.f32.mrf.mxu0
      %v561 = vadd.f32 0.0, %v560
      %v562 = vpop.f32.mrf.mxu0
      %563 = vmatprep.mubr.f32.mxu0 0.0
      %564 = vmatmul.mubr.f32.gmra.mxu0 %v380
      %v565 = vpop.f32.mrf.mxu0
      %v566 = vadd.f32 0.0, %v565
      %v567 = vpop.f32.mrf.mxu0
      %568 = vmatprep.mubr.f32.mxu0 0.0
      %569 = vmatmul.mubr.f32.gmra.mxu0 %v383
      %v570 = vpop.f32.mrf.mxu0
      %v571 = vadd.f32 0.0, %v570
      %v572 = vpop.f32.mrf.mxu0
      %573 = vmatprep.mubr.f32.mxu0 0.0
      %574 = vmatmul.mubr.f32.gmra.mxu0 %v386
      %v575 = vpop.f32.mrf.mxu0
      %v576 = vadd.f32 0.0, %v575
      %v577 = vpop.f32.mrf.mxu0
      %578 = vmatprep.mubr.f32.mxu0 0.0
      %579 = vmatmul.mubr.f32.gmra.mxu0 %v389
      %v580 = vpop.f32.mrf.mxu0
      %v581 = vadd.f32 0.0, %v580
      %v582 = vpop.f32.mrf.mxu0
      %583 = vmatprep.mubr.f32.mxu0 0.0
      %584 = vmatmul.mubr.f32.gmra.mxu0 %v392
      %v585 = vpop.f32.mrf.mxu0
      %v586 = vadd.f32 0.0, %v585
      %v587 = vpop.f32.mrf.mxu0
      %588 = vmatprep.mubr.f32.mxu0 0.0
      %589 = vmatmul.mubr.f32.gmra.mxu0 %v395
      %v590 = vpop.f32.mrf.mxu0
      %v591 = vadd.f32 0.0, %v590
      %v592 = vpop.f32.mrf.mxu0
      %593 = vmatprep.mubr.f32.mxu0 0.0
      %594 = vmatmul.mubr.f32.gmra.mxu0 %v398
      %v595 = vpop.f32.mrf.mxu0
      %v596 = vadd.f32 0.0, %v595
      %v597 = vpop.f32.mrf.mxu0
      %598 = vmatprep.mubr.f32.mxu0 0.0
      %599 = vmatmul.mubr.f32.gmra.mxu0 %v401
      %v600 = vpop.f32.mrf.mxu0
      %v601 = vadd.f32 0.0, %v600
      %v602 = vpop.f32.mrf.mxu0
      %603 = vmatprep.mubr.f32.mxu0 0.0
      %604 = vmatmul.mubr.f32.gmra.mxu0 %v404
      %v605 = vpop.f32.mrf.mxu0
      %v606 = vadd.f32 0.0, %v605
      %v607 = vpop.f32.mrf.mxu0
      %608 = vmatprep.mubr.f32.mxu0 0.0
      %609 = vmatmul.mubr.f32.gmra.mxu0 %v407
      %v610 = vpop.f32.mrf.mxu0
      %v611 = vadd.f32 0.0, %v610
      %v612 = vpop.f32.mrf.mxu0
      %613 = vmatprep.mubr.f32.mxu0 0.0
      %614 = vmatmul.mubr.f32.gmra.mxu0 %v410
      %v615 = vpop.f32.mrf.mxu0
      %v616 = vadd.f32 0.0, %v615
      %v617 = vpop.f32.mrf.mxu0
      %618 = vmatprep.mubr.f32.mxu0 0.0
      %619 = vmatmul.mubr.f32.gmra.mxu0 %v413
      %v620 = vpop.f32.mrf.mxu0
      %v621 = vadd.f32 0.0, %v620
      %v622 = vpop.f32.mrf.mxu0
      %623 = vmatprep.mubr.f32.mxu0 0.0
      %624 = vmatmul.mubr.f32.gmra.mxu0 %v416
      %v625 = vpop.f32.mrf.mxu0
      %v626 = vadd.f32 0.0, %v625
      %v627 = vpop.f32.mrf.mxu0
      %628 = vmatprep.mubr.f32.mxu0 0.0
      %629 = vmatmul.mubr.f32.gmra.mxu0 %v419
      %v630 = vpop.f32.mrf.mxu0
      %v631 = vadd.f32 0.0, %v630
      %v632 = vpop.f32.mrf.mxu0
      %633 = vmatprep.mubr.f32.mxu0 0.0
      %634 = vmatmul.mubr.f32.gmra.mxu0 %v422
      %v635 = vpop.f32.mrf.mxu0
      %v636 = vadd.f32 0.0, %v635
      %v637 = vpop.f32.mrf.mxu0
      %638 = vmatprep.mubr.f32.mxu0 0.0
      %639 = vmatmul.mubr.f32.gmra.mxu0 %v425
      %v640 = vpop.f32.mrf.mxu0
      %v641 = vadd.f32 0.0, %v640
      %v642 = vpop.f32.mrf.mxu0
      %643 = vmatprep.mubr.f32.mxu0 0.0
      %644 = vmatmul.mubr.f32.gmra.mxu0 %v428
      %v645 = vpop.f32.mrf.mxu0
      %v646 = vadd.f32 0.0, %v645
      %v647 = vpop.f32.mrf.mxu0
      %648 = vmatprep.mubr.f32.mxu0 0.0
      %649 = vmatmul.mubr.f32.gmra.mxu0 %v431
      %v650 = vpop.f32.mrf.mxu0
      %v651 = vadd.f32 0.0, %v650
      %v652 = vpop.f32.mrf.mxu0
      %653 = vmatprep.mubr.f32.mxu0 0.0
      %654 = vmatmul.mubr.f32.gmra.mxu0 %v434
      %v655 = vpop.f32.mrf.mxu0
      %v656 = vadd.f32 0.0, %v655
      %v657 = vpop.f32.mrf.mxu0
      %658 = vmatprep.mubr.f32.mxu0 0.0
      %659 = vmatmul.mubr.f32.gmra.mxu0 %v437
      %v660 = vpop.f32.mrf.mxu0
      %v661 = vadd.f32 0.0, %v660
      %v662 = vpop.f32.mrf.mxu0
      %663 = vdwg.mxu0
      %v664 = vmul.f32 %v506, %v309
      %v665 = vmul.f32 %v511, %v310
      %v666 = vmul.f32 %v516, %v311
      %v667 = vmul.f32 %v521, %v312
      %v668 = vmul.f32 %v526, %v313
      %v669 = vmul.f32 %v531, %v314
      %v670 = vmul.f32 %v536, %v315
      %v671 = vmul.f32 %v541, %v316
      %v672 = vmul.f32 %v546, %v317
      %v673 = vmul.f32 %v551, %v318
      %v674 = vmul.f32 %v556, %v319
      %v675 = vmul.f32 %v561, %v320
      %v676 = vmul.f32 %v566, %v321
      %v677 = vmul.f32 %v571, %v322
      %v678 = vmul.f32 %v576, %v323
      %v679 = vmul.f32 %v581, %v324
      %v680 = vmul.f32 %v586, %v325
      %v681 = vmul.f32 %v591, %v326
      %v682 = vmul.f32 %v596, %v327
      %v683 = vmul.f32 %v601, %v328
      %v684 = vmul.f32 %v606, %v329
      %v685 = vmul.f32 %v611, %v330
      %v686 = vmul.f32 %v616, %v331
      %v687 = vmul.f32 %v621, %v332
      %v688 = vmul.f32 %v626, %v333
      %v689 = vmul.f32 %v631, %v334
      %v690 = vmul.f32 %v636, %v335
      %v691 = vmul.f32 %v641, %v336
      %v692 = vmul.f32 %v646, %v337
      %v693 = vmul.f32 %v651, %v338
      %v694 = vmul.f32 %v656, %v339
      %v695 = vmul.f32 %v661, %v340
      %v696 = vld [vmem:[%s3] sm:$0xff]
      %v697 = vld [vmem:[%s3 + $0x8] sm:$0xff]
      %v698 = vld [vmem:[%s3 + $0x10] sm:$0xff]
      %v699 = vld [vmem:[%s3 + $0x18] sm:$0xff]
      %v700 = vld [vmem:[%s3 + $0x20] sm:$0xff]
      %v701 = vld [vmem:[%s3 + $0x28] sm:$0xff]
      %v702 = vld [vmem:[%s3 + $0x30] sm:$0xff]
      %v703 = vld [vmem:[%s3 + $0x38] sm:$0xff]
      %v704 = vld [vmem:[%s4] sm:$0x1]
      %v705 = vlaneseq
      %v706 = vshrl.u32 %v705, 7
      %v707 = vsub.s32 0, %v706
      %v708 = vrot.slane %v704, %v707
      %vm709 = vcmask 523264
      %v711 = vsel %vm709, %v664, 0
      %v714 = vsel %vm709, %v665, 0
      %v717 = vsel %vm709, %v666, 0
      %v720 = vsel %vm709, %v667, 0
      %v723 = vsel %vm709, %v668, 0
      %v726 = vsel %vm709, %v669, 0
      %v729 = vsel %vm709, %v670, 0
      %v732 = vsel %vm709, %v671, 0
      %v735 = vsel %vm709, %v672, 0
      %v738 = vsel %vm709, %v673, 0
      %v741 = vsel %vm709, %v674, 0
      %v744 = vsel %vm709, %v675, 0
      %v747 = vsel %vm709, %v676, 0
      %v750 = vsel %vm709, %v677, 0
      %v753 = vsel %vm709, %v678, 0
      %v756 = vsel %vm709, %v679, 0
      %v759 = vsel %vm709, %v680, 0
      %v762 = vsel %vm709, %v681, 0
      %v765 = vsel %vm709, %v682, 0
      %v768 = vsel %vm709, %v683, 0
      %v771 = vsel %vm709, %v684, 0
      %v774 = vsel %vm709, %v685, 0
      %v777 = vsel %vm709, %v686, 0
      %v780 = vsel %vm709, %v687, 0
      %v783 = vsel %vm709, %v688, 0
      %v786 = vsel %vm709, %v689, 0
      %v789 = vsel %vm709, %v690, 0
      %v792 = vsel %vm709, %v691, 0
      %v795 = vsel %vm709, %v692, 0
      %v798 = vsel %vm709, %v693, 0
      %v801 = vsel %vm709, %v694, 0
      %v804 = vsel %vm709, %v695, 0
      %806 = vmatprep.subr.mxu0 0.0
      %807 = vmatpush1.msra.mxu0 0.0
      %808 = vmatprep.subr.mxu0 0.0
      %809 = vmatpush1.msra.mxu0 0.0
      %810 = vmatprep.subr.mxu0 0.0
      %811 = vmatpush1.msra.mxu0 0.0
      %812 = vmatprep.subr.mxu0 0.0
      %813 = vmatpush1.msra.mxu0 0.0
      %814 = vmatprep.subr.mxu0 0.0
      %815 = vmatpush1.msra.mxu0 0.0
      %816 = vmatprep.subr.mxu0 0.0
      %817 = vmatpush1.msra.mxu0 0.0
      %818 = vmatprep.subr.mxu0 0.0
      %819 = vmatpush1.msra.mxu0 0.0
      %820 = vmatprep.subr.mxu0 0.0
      %821 = vmatpush1.msra.mxu0 0.0
      %822 = vmatprep.subr.mxu0 0.0
      %823 = vmatpush1.msra.mxu0 %v703
      %824 = vmatprep.subr.mxu0 0.0
      %825 = vmatpush1.msra.mxu0 %v702
      %826 = vmatprep.subr.mxu0 0.0
      %827 = vmatpush1.msra.mxu0 %v701
      %828 = vmatprep.subr.mxu0 0.0
      %829 = vmatpush1.msra.mxu0 %v700
      %830 = vmatprep.subr.mxu0 0.0
      %831 = vmatpush1.msra.mxu0 %v699
      %832 = vmatprep.subr.mxu0 0.0
      %833 = vmatpush1.msra.mxu0 %v698
      %834 = vmatprep.subr.mxu0 0.0
      %835 = vmatpush1.msra.mxu0 %v697
      %836 = vmatprep.subr.mxu0 0.0
      %837 = vmatpush1.msra.mxu0 %v696
      %838 = vmatprep.subr.mxu0 0.0
      %839 = vmatpush2.msra.mxu0 0.0
      %840 = vmatprep.subr.mxu0 0.0
      %841 = vmatpush2.msra.mxu0 0.0
      %842 = vmatprep.subr.mxu0 0.0
      %843 = vmatpush2.msra.mxu0 0.0
      %844 = vmatprep.subr.mxu0 0.0
      %845 = vmatpush2.msra.mxu0 0.0
      %846 = vmatprep.subr.mxu0 0.0
      %847 = vmatpush2.msra.mxu0 0.0
      %848 = vmatprep.subr.mxu0 0.0
      %849 = vmatpush2.msra.mxu0 0.0
      %850 = vmatprep.subr.mxu0 0.0
      %851 = vmatpush2.msra.mxu0 0.0
      %852 = vmatprep.subr.mxu0 0.0
      %853 = vmatpush2.msra.mxu0 0.0
      %854 = vmatprep.subr.mxu0 0.0
      %855 = vmatpush2.msra.mxu0 0.0
      %856 = vmatprep.subr.mxu0 0.0
      %857 = vmatpush2.msra.mxu0 0.0
      %858 = vmatprep.subr.mxu0 0.0
      %859 = vmatpush2.msra.mxu0 0.0
      %860 = vmatprep.subr.mxu0 0.0
      %861 = vmatpush2.msra.mxu0 0.0
      %862 = vmatprep.subr.mxu0 0.0
      %863 = vmatpush2.msra.mxu0 0.0
      %864 = vmatprep.subr.mxu0 0.0
      %865 = vmatpush2.msra.mxu0 0.0
      %866 = vmatprep.subr.mxu0 0.0
      %867 = vmatpush2.msra.mxu0 0.0
      %868 = vmatprep.subr.mxu0 0.0
      %869 = vmatpush2.msra.mxu0 0.0
      %870 = vmatprep.mubr.f32.mxu0 0.0
      %871 = vmatmul.mubr.f32.gmra.mxu0 %v711
      %v872 = vpop.f32.mrf.mxu0
      %v873 = vadd.f32 %v708, %v872
      %v874 = vpop.f32.mrf.mxu0
      %875 = vmatprep.mubr.f32.mxu0 0.0
      %876 = vmatmul.mubr.f32.gmra.mxu0 %v714
      %v877 = vpop.f32.mrf.mxu0
      %v878 = vadd.f32 %v708, %v877
      %v879 = vpop.f32.mrf.mxu0
      %880 = vmatprep.mubr.f32.mxu0 0.0
      %881 = vmatmul.mubr.f32.gmra.mxu0 %v717
      %v882 = vpop.f32.mrf.mxu0
      %v883 = vadd.f32 %v708, %v882
      %v884 = vpop.f32.mrf.mxu0
      %885 = vmatprep.mubr.f32.mxu0 0.0
      %886 = vmatmul.mubr.f32.gmra.mxu0 %v720
      %v887 = vpop.f32.mrf.mxu0
      %v888 = vadd.f32 %v708, %v887
      %v889 = vpop.f32.mrf.mxu0
      %890 = vmatprep.mubr.f32.mxu0 0.0
      %891 = vmatmul.mubr.f32.gmra.mxu0 %v723
      %v892 = vpop.f32.mrf.mxu0
      %v893 = vadd.f32 %v708, %v892
      %v894 = vpop.f32.mrf.mxu0
      %895 = vmatprep.mubr.f32.mxu0 0.0
      %896 = vmatmul.mubr.f32.gmra.mxu0 %v726
      %v897 = vpop.f32.mrf.mxu0
      %v898 = vadd.f32 %v708, %v897
      %v899 = vpop.f32.mrf.mxu0
      %900 = vmatprep.mubr.f32.mxu0 0.0
      %901 = vmatmul.mubr.f32.gmra.mxu0 %v729
      %v902 = vpop.f32.mrf.mxu0
      %v903 = vadd.f32 %v708, %v902
      %v904 = vpop.f32.mrf.mxu0
      %905 = vmatprep.mubr.f32.mxu0 0.0
      %906 = vmatmul.mubr.f32.gmra.mxu0 %v732
      %v907 = vpop.f32.mrf.mxu0
      %v908 = vadd.f32 %v708, %v907
      %v909 = vpop.f32.mrf.mxu0
      %910 = vmatprep.mubr.f32.mxu0 0.0
      %911 = vmatmul.mubr.f32.gmra.mxu0 %v735
      %v912 = vpop.f32.mrf.mxu0
      %v913 = vadd.f32 %v708, %v912
      %v914 = vpop.f32.mrf.mxu0
      %915 = vmatprep.mubr.f32.mxu0 0.0
      %916 = vmatmul.mubr.f32.gmra.mxu0 %v738
      %v917 = vpop.f32.mrf.mxu0
      %v918 = vadd.f32 %v708, %v917
      %v919 = vpop.f32.mrf.mxu0
      %920 = vmatprep.mubr.f32.mxu0 0.0
      %921 = vmatmul.mubr.f32.gmra.mxu0 %v741
      %v922 = vpop.f32.mrf.mxu0
      %v923 = vadd.f32 %v708, %v922
      %v924 = vpop.f32.mrf.mxu0
      %925 = vmatprep.mubr.f32.mxu0 0.0
      %926 = vmatmul.mubr.f32.gmra.mxu0 %v744
      %v927 = vpop.f32.mrf.mxu0
      %v928 = vadd.f32 %v708, %v927
      %v929 = vpop.f32.mrf.mxu0
      %930 = vmatprep.mubr.f32.mxu0 0.0
      %931 = vmatmul.mubr.f32.gmra.mxu0 %v747
      %v932 = vpop.f32.mrf.mxu0
      %v933 = vadd.f32 %v708, %v932
      %v934 = vpop.f32.mrf.mxu0
      %935 = vmatprep.mubr.f32.mxu0 0.0
      %936 = vmatmul.mubr.f32.gmra.mxu0 %v750
      %v937 = vpop.f32.mrf.mxu0
      %v938 = vadd.f32 %v708, %v937
      %v939 = vpop.f32.mrf.mxu0
      %940 = vmatprep.mubr.f32.mxu0 0.0
      %941 = vmatmul.mubr.f32.gmra.mxu0 %v753
      %v942 = vpop.f32.mrf.mxu0
      %v943 = vadd.f32 %v708, %v942
      %v944 = vpop.f32.mrf.mxu0
      %945 = vmatprep.mubr.f32.mxu0 0.0
      %946 = vmatmul.mubr.f32.gmra.mxu0 %v756
      %v947 = vpop.f32.mrf.mxu0
      %v948 = vadd.f32 %v708, %v947
      %v949 = vpop.f32.mrf.mxu0
      %950 = vmatprep.mubr.f32.mxu0 0.0
      %951 = vmatmul.mubr.f32.gmra.mxu0 %v759
      %v952 = vpop.f32.mrf.mxu0
      %v953 = vadd.f32 %v708, %v952
      %v954 = vpop.f32.mrf.mxu0
      %955 = vmatprep.mubr.f32.mxu0 0.0
      %956 = vmatmul.mubr.f32.gmra.mxu0 %v762
      %v957 = vpop.f32.mrf.mxu0
      %v958 = vadd.f32 %v708, %v957
      %v959 = vpop.f32.mrf.mxu0
      %960 = vmatprep.mubr.f32.mxu0 0.0
      %961 = vmatmul.mubr.f32.gmra.mxu0 %v765
      %v962 = vpop.f32.mrf.mxu0
      %v963 = vadd.f32 %v708, %v962
      %v964 = vpop.f32.mrf.mxu0
      %965 = vmatprep.mubr.f32.mxu0 0.0
      %966 = vmatmul.mubr.f32.gmra.mxu0 %v768
      %v967 = vpop.f32.mrf.mxu0
      %v968 = vadd.f32 %v708, %v967
      %v969 = vpop.f32.mrf.mxu0
      %970 = vmatprep.mubr.f32.mxu0 0.0
      %971 = vmatmul.mubr.f32.gmra.mxu0 %v771
      %v972 = vpop.f32.mrf.mxu0
      %v973 = vadd.f32 %v708, %v972
      %v974 = vpop.f32.mrf.mxu0
      %975 = vmatprep.mubr.f32.mxu0 0.0
      %976 = vmatmul.mubr.f32.gmra.mxu0 %v774
      %v977 = vpop.f32.mrf.mxu0
      %v978 = vadd.f32 %v708, %v977
      %v979 = vpop.f32.mrf.mxu0
      %980 = vmatprep.mubr.f32.mxu0 0.0
      %981 = vmatmul.mubr.f32.gmra.mxu0 %v777
      %v982 = vpop.f32.mrf.mxu0
      %v983 = vadd.f32 %v708, %v982
      %v984 = vpop.f32.mrf.mxu0
      %985 = vmatprep.mubr.f32.mxu0 0.0
      %986 = vmatmul.mubr.f32.gmra.mxu0 %v780
      %v987 = vpop.f32.mrf.mxu0
      %v988 = vadd.f32 %v708, %v987
      %v989 = vpop.f32.mrf.mxu0
      %990 = vmatprep.mubr.f32.mxu0 0.0
      %991 = vmatmul.mubr.f32.gmra.mxu0 %v783
      %v992 = vpop.f32.mrf.mxu0
      %v993 = vadd.f32 %v708, %v992
      %v994 = vpop.f32.mrf.mxu0
      %995 = vmatprep.mubr.f32.mxu0 0.0
      %996 = vmatmul.mubr.f32.gmra.mxu0 %v786
      %v997 = vpop.f32.mrf.mxu0
      %v998 = vadd.f32 %v708, %v997
      %v999 = vpop.f32.mrf.mxu0
      %1000 = vmatprep.mubr.f32.mxu0 0.0
      %1001 = vmatmul.mubr.f32.gmra.mxu0 %v789
      %v1002 = vpop.f32.mrf.mxu0
      %v1003 = vadd.f32 %v708, %v1002
      %v1004 = vpop.f32.mrf.mxu0
      %1005 = vmatprep.mubr.f32.mxu0 0.0
      %1006 = vmatmul.mubr.f32.gmra.mxu0 %v792
      %v1007 = vpop.f32.mrf.mxu0
      %v1008 = vadd.f32 %v708, %v1007
      %v1009 = vpop.f32.mrf.mxu0
      %1010 = vmatprep.mubr.f32.mxu0 0.0
      %1011 = vmatmul.mubr.f32.gmra.mxu0 %v795
      %v1012 = vpop.f32.mrf.mxu0
      %v1013 = vadd.f32 %v708, %v1012
      %v1014 = vpop.f32.mrf.mxu0
      %1015 = vmatprep.mubr.f32.mxu0 0.0
      %1016 = vmatmul.mubr.f32.gmra.mxu0 %v798
      %v1017 = vpop.f32.mrf.mxu0
      %v1018 = vadd.f32 %v708, %v1017
      %v1019 = vpop.f32.mrf.mxu0
      %1020 = vmatprep.mubr.f32.mxu0 0.0
      %1021 = vmatmul.mubr.f32.gmra.mxu0 %v801
      %v1022 = vpop.f32.mrf.mxu0
      %v1023 = vadd.f32 %v708, %v1022
      %v1024 = vpop.f32.mrf.mxu0
      %1025 = vmatprep.mubr.f32.mxu0 0.0
      %1026 = vmatmul.mubr.f32.gmra.mxu0 %v804
      %v1027 = vpop.f32.mrf.mxu0
      %v1028 = vadd.f32 %v708, %v1027
      %v1029 = vpop.f32.mrf.mxu0
      %1030 = vdwg.mxu0
      %vm1031 = vcmask 261120
      %v1032 = vsel %vm1031, %v873, 0.0
      %1033 = vadd.xlane.f32.xlu0 %v1032
      %v1034 = vpop.xlane.xlu0 %1033
      %v1035 = vsel %vm1031, %v878, 0.0
      %1036 = vadd.xlane.f32.xlu0 %v1035
      %v1037 = vpop.xlane.xlu0 %1036
      %v1038 = vsel %vm1031, %v883, 0.0
      %1039 = vadd.xlane.f32.xlu0 %v1038
      %v1040 = vpop.xlane.xlu0 %1039
      %v1041 = vsel %vm1031, %v888, 0.0
      %1042 = vadd.xlane.f32.xlu0 %v1041
      %v1043 = vpop.xlane.xlu0 %1042
      %v1044 = vsel %vm1031, %v893, 0.0
      %1045 = vadd.xlane.f32.xlu0 %v1044
      %v1046 = vpop.xlane.xlu0 %1045
      %v1047 = vsel %vm1031, %v898, 0.0
      %1048 = vadd.xlane.f32.xlu0 %v1047
      %v1049 = vpop.xlane.xlu0 %1048
      %v1050 = vsel %vm1031, %v903, 0.0
      %1051 = vadd.xlane.f32.xlu0 %v1050
      %v1052 = vpop.xlane.xlu0 %1051
      %v1053 = vsel %vm1031, %v908, 0.0
      %1054 = vadd.xlane.f32.xlu0 %v1053
      %v1055 = vpop.xlane.xlu0 %1054
      %v1056 = vsel %vm1031, %v913, 0.0
      %1057 = vadd.xlane.f32.xlu0 %v1056
      %v1058 = vpop.xlane.xlu0 %1057
      %v1059 = vsel %vm1031, %v918, 0.0
      %1060 = vadd.xlane.f32.xlu0 %v1059
      %v1061 = vpop.xlane.xlu0 %1060
      %v1062 = vsel %vm1031, %v923, 0.0
      %1063 = vadd.xlane.f32.xlu0 %v1062
      %v1064 = vpop.xlane.xlu0 %1063
      %v1065 = vsel %vm1031, %v928, 0.0
      %1066 = vadd.xlane.f32.xlu0 %v1065
      %v1067 = vpop.xlane.xlu0 %1066
      %v1068 = vsel %vm1031, %v933, 0.0
      %1069 = vadd.xlane.f32.xlu0 %v1068
      %v1070 = vpop.xlane.xlu0 %1069
      %v1071 = vsel %vm1031, %v938, 0.0
      %1072 = vadd.xlane.f32.xlu0 %v1071
      %v1073 = vpop.xlane.xlu0 %1072
      %v1074 = vsel %vm1031, %v943, 0.0
      %1075 = vadd.xlane.f32.xlu0 %v1074
      %v1076 = vpop.xlane.xlu0 %1075
      %v1077 = vsel %vm1031, %v948, 0.0
      %1078 = vadd.xlane.f32.xlu0 %v1077
      %v1079 = vpop.xlane.xlu0 %1078
      %v1080 = vsel %vm1031, %v953, 0.0
      %1081 = vadd.xlane.f32.xlu0 %v1080
      %v1082 = vpop.xlane.xlu0 %1081
      %v1083 = vsel %vm1031, %v958, 0.0
      %1084 = vadd.xlane.f32.xlu0 %v1083
      %v1085 = vpop.xlane.xlu0 %1084
      %v1086 = vsel %vm1031, %v963, 0.0
      %1087 = vadd.xlane.f32.xlu0 %v1086
      %v1088 = vpop.xlane.xlu0 %1087
      %v1089 = vsel %vm1031, %v968, 0.0
      %1090 = vadd.xlane.f32.xlu0 %v1089
      %v1091 = vpop.xlane.xlu0 %1090
      %v1092 = vsel %vm1031, %v973, 0.0
      %1093 = vadd.xlane.f32.xlu0 %v1092
      %v1094 = vpop.xlane.xlu0 %1093
      %v1095 = vsel %vm1031, %v978, 0.0
      %1096 = vadd.xlane.f32.xlu0 %v1095
      %v1097 = vpop.xlane.xlu0 %1096
      %v1098 = vsel %vm1031, %v983, 0.0
      %1099 = vadd.xlane.f32.xlu0 %v1098
      %v1100 = vpop.xlane.xlu0 %1099
      %v1101 = vsel %vm1031, %v988, 0.0
      %1102 = vadd.xlane.f32.xlu0 %v1101
      %v1103 = vpop.xlane.xlu0 %1102
      %v1104 = vsel %vm1031, %v993, 0.0
      %1105 = vadd.xlane.f32.xlu0 %v1104
      %v1106 = vpop.xlane.xlu0 %1105
      %v1107 = vsel %vm1031, %v998, 0.0
      %1108 = vadd.xlane.f32.xlu0 %v1107
      %v1109 = vpop.xlane.xlu0 %1108
      %v1110 = vsel %vm1031, %v1003, 0.0
      %1111 = vadd.xlane.f32.xlu0 %v1110
      %v1112 = vpop.xlane.xlu0 %1111
      %v1113 = vsel %vm1031, %v1008, 0.0
      %1114 = vadd.xlane.f32.xlu0 %v1113
      %v1115 = vpop.xlane.xlu0 %1114
      %v1116 = vsel %vm1031, %v1013, 0.0
      %1117 = vadd.xlane.f32.xlu0 %v1116
      %v1118 = vpop.xlane.xlu0 %1117
      %v1119 = vsel %vm1031, %v1018, 0.0
      %1120 = vadd.xlane.f32.xlu0 %v1119
      %v1121 = vpop.xlane.xlu0 %1120
      %v1122 = vsel %vm1031, %v1023, 0.0
      %1123 = vadd.xlane.f32.xlu0 %v1122
      %v1124 = vpop.xlane.xlu0 %1123
      %v1125 = vsel %vm1031, %v1028, 0.0
      %1126 = vadd.xlane.f32.xlu0 %v1125
      %v1127 = vpop.xlane.xlu0 %1126
      %v1128 = vrcp.pop 32.0
      %v1129 = vmul.f32 %v1034, %v1128
      %v1130 = vmul.f32 %v1037, %v1128
      %v1131 = vmul.f32 %v1040, %v1128
      %v1132 = vmul.f32 %v1043, %v1128
      %v1133 = vmul.f32 %v1046, %v1128
      %v1134 = vmul.f32 %v1049, %v1128
      %v1135 = vmul.f32 %v1052, %v1128
      %v1136 = vmul.f32 %v1055, %v1128
      %v1137 = vmul.f32 %v1058, %v1128
      %v1138 = vmul.f32 %v1061, %v1128
      %v1139 = vmul.f32 %v1064, %v1128
      %v1140 = vmul.f32 %v1067, %v1128
      %v1141 = vmul.f32 %v1070, %v1128
      %v1142 = vmul.f32 %v1073, %v1128
      %v1143 = vmul.f32 %v1076, %v1128
      %v1144 = vmul.f32 %v1079, %v1128
      %v1145 = vmul.f32 %v1082, %v1128
      %v1146 = vmul.f32 %v1085, %v1128
      %v1147 = vmul.f32 %v1088, %v1128
      %v1148 = vmul.f32 %v1091, %v1128
      %v1149 = vmul.f32 %v1094, %v1128
      %v1150 = vmul.f32 %v1097, %v1128
      %v1151 = vmul.f32 %v1100, %v1128
      %v1152 = vmul.f32 %v1103, %v1128
      %v1153 = vmul.f32 %v1106, %v1128
      %v1154 = vmul.f32 %v1109, %v1128
      %v1155 = vmul.f32 %v1112, %v1128
      %v1156 = vmul.f32 %v1115, %v1128
      %v1157 = vmul.f32 %v1118, %v1128
      %v1158 = vmul.f32 %v1121, %v1128
      %v1159 = vmul.f32 %v1124, %v1128
      %v1160 = vmul.f32 %v1127, %v1128
      %v1161 = vsub.f32 %v873, %v1129
      %v1162 = vsub.f32 %v878, %v1130
      %v1163 = vsub.f32 %v883, %v1131
      %v1164 = vsub.f32 %v888, %v1132
      %v1165 = vsub.f32 %v893, %v1133
      %v1166 = vsub.f32 %v898, %v1134
      %v1167 = vsub.f32 %v903, %v1135
      %v1168 = vsub.f32 %v908, %v1136
      %v1169 = vsub.f32 %v913, %v1137
      %v1170 = vsub.f32 %v918, %v1138
      %v1171 = vsub.f32 %v923, %v1139
      %v1172 = vsub.f32 %v928, %v1140
      %v1173 = vsub.f32 %v933, %v1141
      %v1174 = vsub.f32 %v938, %v1142
      %v1175 = vsub.f32 %v943, %v1143
      %v1176 = vsub.f32 %v948, %v1144
      %v1177 = vsub.f32 %v953, %v1145
      %v1178 = vsub.f32 %v958, %v1146
      %v1179 = vsub.f32 %v963, %v1147
      %v1180 = vsub.f32 %v968, %v1148
      %v1181 = vsub.f32 %v973, %v1149
      %v1182 = vsub.f32 %v978, %v1150
      %v1183 = vsub.f32 %v983, %v1151
      %v1184 = vsub.f32 %v988, %v1152
      %v1185 = vsub.f32 %v993, %v1153
      %v1186 = vsub.f32 %v998, %v1154
      %v1187 = vsub.f32 %v1003, %v1155
      %v1188 = vsub.f32 %v1008, %v1156
      %v1189 = vsub.f32 %v1013, %v1157
      %v1190 = vsub.f32 %v1018, %v1158
      %v1191 = vsub.f32 %v1023, %v1159
      %v1192 = vsub.f32 %v1028, %v1160
      %v1193 = vmul.f32 %v1161, %v1161
      %v1194 = vmul.f32 %v1162, %v1162
      %v1195 = vmul.f32 %v1163, %v1163
      %v1196 = vmul.f32 %v1164, %v1164
      %v1197 = vmul.f32 %v1165, %v1165
      %v1198 = vmul.f32 %v1166, %v1166
      %v1199 = vmul.f32 %v1167, %v1167
      %v1200 = vmul.f32 %v1168, %v1168
      %v1201 = vmul.f32 %v1169, %v1169
      %v1202 = vmul.f32 %v1170, %v1170
      %v1203 = vmul.f32 %v1171, %v1171
      %v1204 = vmul.f32 %v1172, %v1172
      %v1205 = vmul.f32 %v1173, %v1173
      %v1206 = vmul.f32 %v1174, %v1174
      %v1207 = vmul.f32 %v1175, %v1175
      %v1208 = vmul.f32 %v1176, %v1176
      %v1209 = vmul.f32 %v1177, %v1177
      %v1210 = vmul.f32 %v1178, %v1178
      %v1211 = vmul.f32 %v1179, %v1179
      %v1212 = vmul.f32 %v1180, %v1180
      %v1213 = vmul.f32 %v1181, %v1181
      %v1214 = vmul.f32 %v1182, %v1182
      %v1215 = vmul.f32 %v1183, %v1183
      %v1216 = vmul.f32 %v1184, %v1184
      %v1217 = vmul.f32 %v1185, %v1185
      %v1218 = vmul.f32 %v1186, %v1186
      %v1219 = vmul.f32 %v1187, %v1187
      %v1220 = vmul.f32 %v1188, %v1188
      %v1221 = vmul.f32 %v1189, %v1189
      %v1222 = vmul.f32 %v1190, %v1190
      %v1223 = vmul.f32 %v1191, %v1191
      %v1224 = vmul.f32 %v1192, %v1192
      %v1225 = vsel %vm1031, %v1193, 0.0
      %1226 = vadd.xlane.f32.xlu0 %v1225
      %v1227 = vpop.xlane.xlu0 %1226
      %v1228 = vsel %vm1031, %v1194, 0.0
      %1229 = vadd.xlane.f32.xlu0 %v1228
      %v1230 = vpop.xlane.xlu0 %1229
      %v1231 = vsel %vm1031, %v1195, 0.0
      %1232 = vadd.xlane.f32.xlu0 %v1231
      %v1233 = vpop.xlane.xlu0 %1232
      %v1234 = vsel %vm1031, %v1196, 0.0
      %1235 = vadd.xlane.f32.xlu0 %v1234
      %v1236 = vpop.xlane.xlu0 %1235
      %v1237 = vsel %vm1031, %v1197, 0.0
      %1238 = vadd.xlane.f32.xlu0 %v1237
      %v1239 = vpop.xlane.xlu0 %1238
      %v1240 = vsel %vm1031, %v1198, 0.0
      %1241 = vadd.xlane.f32.xlu0 %v1240
      %v1242 = vpop.xlane.xlu0 %1241
      %v1243 = vsel %vm1031, %v1199, 0.0
      %1244 = vadd.xlane.f32.xlu0 %v1243
      %v1245 = vpop.xlane.xlu0 %1244
      %v1246 = vsel %vm1031, %v1200, 0.0
      %1247 = vadd.xlane.f32.xlu0 %v1246
      %v1248 = vpop.xlane.xlu0 %1247
      %v1249 = vsel %vm1031, %v1201, 0.0
      %1250 = vadd.xlane.f32.xlu0 %v1249
      %v1251 = vpop.xlane.xlu0 %1250
      %v1252 = vsel %vm1031, %v1202, 0.0
      %1253 = vadd.xlane.f32.xlu0 %v1252
      %v1254 = vpop.xlane.xlu0 %1253
      %v1255 = vsel %vm1031, %v1203, 0.0
      %1256 = vadd.xlane.f32.xlu0 %v1255
      %v1257 = vpop.xlane.xlu0 %1256
      %v1258 = vsel %vm1031, %v1204, 0.0
      %1259 = vadd.xlane.f32.xlu0 %v1258
      %v1260 = vpop.xlane.xlu0 %1259
      %v1261 = vsel %vm1031, %v1205, 0.0
      %1262 = vadd.xlane.f32.xlu0 %v1261
      %v1263 = vpop.xlane.xlu0 %1262
      %v1264 = vsel %vm1031, %v1206, 0.0
      %1265 = vadd.xlane.f32.xlu0 %v1264
      %v1266 = vpop.xlane.xlu0 %1265
      %v1267 = vsel %vm1031, %v1207, 0.0
      %1268 = vadd.xlane.f32.xlu0 %v1267
      %v1269 = vpop.xlane.xlu0 %1268
      %v1270 = vsel %vm1031, %v1208, 0.0
      %1271 = vadd.xlane.f32.xlu0 %v1270
      %v1272 = vpop.xlane.xlu0 %1271
      %v1273 = vsel %vm1031, %v1209, 0.0
      %1274 = vadd.xlane.f32.xlu0 %v1273
      %v1275 = vpop.xlane.xlu0 %1274
      %v1276 = vsel %vm1031, %v1210, 0.0
      %1277 = vadd.xlane.f32.xlu0 %v1276
      %v1278 = vpop.xlane.xlu0 %1277
      %v1279 = vsel %vm1031, %v1211, 0.0
      %1280 = vadd.xlane.f32.xlu0 %v1279
      %v1281 = vpop.xlane.xlu0 %1280
      %v1282 = vsel %vm1031, %v1212, 0.0
      %1283 = vadd.xlane.f32.xlu0 %v1282
      %v1284 = vpop.xlane.xlu0 %1283
      %v1285 = vsel %vm1031, %v1213, 0.0
      %1286 = vadd.xlane.f32.xlu0 %v1285
      %v1287 = vpop.xlane.xlu0 %1286
      %v1288 = vsel %vm1031, %v1214, 0.0
      %1289 = vadd.xlane.f32.xlu0 %v1288
      %v1290 = vpop.xlane.xlu0 %1289
      %v1291 = vsel %vm1031, %v1215, 0.0
      %1292 = vadd.xlane.f32.xlu0 %v1291
      %v1293 = vpop.xlane.xlu0 %1292
      %v1294 = vsel %vm1031, %v1216, 0.0
      %1295 = vadd.xlane.f32.xlu0 %v1294
      %v1296 = vpop.xlane.xlu0 %1295
      %v1297 = vsel %vm1031, %v1217, 0.0
      %1298 = vadd.xlane.f32.xlu0 %v1297
      %v1299 = vpop.xlane.xlu0 %1298
      %v1300 = vsel %vm1031, %v1218, 0.0
      %1301 = vadd.xlane.f32.xlu0 %v1300
      %v1302 = vpop.xlane.xlu0 %1301
      %v1303 = vsel %vm1031, %v1219, 0.0
      %1304 = vadd.xlane.f32.xlu0 %v1303
      %v1305 = vpop.xlane.xlu0 %1304
      %v1306 = vsel %vm1031, %v1220, 0.0
      %1307 = vadd.xlane.f32.xlu0 %v1306
      %v1308 = vpop.xlane.xlu0 %1307
      %v1309 = vsel %vm1031, %v1221, 0.0
      %1310 = vadd.xlane.f32.xlu0 %v1309
      %v1311 = vpop.xlane.xlu0 %1310
      %v1312 = vsel %vm1031, %v1222, 0.0
      %1313 = vadd.xlane.f32.xlu0 %v1312
      %v1314 = vpop.xlane.xlu0 %1313
      %v1315 = vsel %vm1031, %v1223, 0.0
      %1316 = vadd.xlane.f32.xlu0 %v1315
      %v1317 = vpop.xlane.xlu0 %1316
      %v1318 = vsel %vm1031, %v1224, 0.0
      %1319 = vadd.xlane.f32.xlu0 %v1318
      %v1320 = vpop.xlane.xlu0 %1319
      %v1321 = vmul.f32 %v1227, %v1128
      %v1322 = vmul.f32 %v1230, %v1128
      %v1323 = vmul.f32 %v1233, %v1128
      %v1324 = vmul.f32 %v1236, %v1128
      %v1325 = vmul.f32 %v1239, %v1128
      %v1326 = vmul.f32 %v1242, %v1128
      %v1327 = vmul.f32 %v1245, %v1128
      %v1328 = vmul.f32 %v1248, %v1128
      %v1329 = vmul.f32 %v1251, %v1128
      %v1330 = vmul.f32 %v1254, %v1128
      %v1331 = vmul.f32 %v1257, %v1128
      %v1332 = vmul.f32 %v1260, %v1128
      %v1333 = vmul.f32 %v1263, %v1128
      %v1334 = vmul.f32 %v1266, %v1128
      %v1335 = vmul.f32 %v1269, %v1128
      %v1336 = vmul.f32 %v1272, %v1128
      %v1337 = vmul.f32 %v1275, %v1128
      %v1338 = vmul.f32 %v1278, %v1128
      %v1339 = vmul.f32 %v1281, %v1128
      %v1340 = vmul.f32 %v1284, %v1128
      %v1341 = vmul.f32 %v1287, %v1128
      %v1342 = vmul.f32 %v1290, %v1128
      %v1343 = vmul.f32 %v1293, %v1128
      %v1344 = vmul.f32 %v1296, %v1128
      %v1345 = vmul.f32 %v1299, %v1128
      %v1346 = vmul.f32 %v1302, %v1128
      %v1347 = vmul.f32 %v1305, %v1128
      %v1348 = vmul.f32 %v1308, %v1128
      %v1349 = vmul.f32 %v1311, %v1128
      %v1350 = vmul.f32 %v1314, %v1128
      %v1351 = vmul.f32 %v1317, %v1128
      %v1352 = vmul.f32 %v1320, %v1128
      %v1353 = vadd.f32 %v1321, 1e-05
      %v1354 = vadd.f32 %v1322, 1e-05
      %v1355 = vadd.f32 %v1323, 1e-05
      %v1356 = vadd.f32 %v1324, 1e-05
      %v1357 = vadd.f32 %v1325, 1e-05
      %v1358 = vadd.f32 %v1326, 1e-05
      %v1359 = vadd.f32 %v1327, 1e-05
      %v1360 = vadd.f32 %v1328, 1e-05
      %v1361 = vadd.f32 %v1329, 1e-05
      %v1362 = vadd.f32 %v1330, 1e-05
      %v1363 = vadd.f32 %v1331, 1e-05
      %v1364 = vadd.f32 %v1332, 1e-05
      %v1365 = vadd.f32 %v1333, 1e-05
      %v1366 = vadd.f32 %v1334, 1e-05
      %v1367 = vadd.f32 %v1335, 1e-05
      %v1368 = vadd.f32 %v1336, 1e-05
      %v1369 = vadd.f32 %v1337, 1e-05
      %v1370 = vadd.f32 %v1338, 1e-05
      %v1371 = vadd.f32 %v1339, 1e-05
      %v1372 = vadd.f32 %v1340, 1e-05
      %v1373 = vadd.f32 %v1341, 1e-05
      %v1374 = vadd.f32 %v1342, 1e-05
      %v1375 = vadd.f32 %v1343, 1e-05
      %v1376 = vadd.f32 %v1344, 1e-05
      %v1377 = vadd.f32 %v1345, 1e-05
      %v1378 = vadd.f32 %v1346, 1e-05
      %v1379 = vadd.f32 %v1347, 1e-05
      %v1380 = vadd.f32 %v1348, 1e-05
      %v1381 = vadd.f32 %v1349, 1e-05
      %v1382 = vadd.f32 %v1350, 1e-05
      %v1383 = vadd.f32 %v1351, 1e-05
      %v1384 = vadd.f32 %v1352, 1e-05
      %v1385 = vrsqrt.pop %v1353
      %v1386 = vrsqrt.pop %v1354
      %v1387 = vrsqrt.pop %v1355
      %v1388 = vrsqrt.pop %v1356
      %v1389 = vrsqrt.pop %v1357
      %v1390 = vrsqrt.pop %v1358
      %v1391 = vrsqrt.pop %v1359
      %v1392 = vrsqrt.pop %v1360
      %v1393 = vrsqrt.pop %v1361
      %v1394 = vrsqrt.pop %v1362
      %v1395 = vrsqrt.pop %v1363
      %v1396 = vrsqrt.pop %v1364
      %v1397 = vrsqrt.pop %v1365
      %v1398 = vrsqrt.pop %v1366
      %v1399 = vrsqrt.pop %v1367
      %v1400 = vrsqrt.pop %v1368
      %v1401 = vrsqrt.pop %v1369
      %v1402 = vrsqrt.pop %v1370
      %v1403 = vrsqrt.pop %v1371
      %v1404 = vrsqrt.pop %v1372
      %v1405 = vrsqrt.pop %v1373
      %v1406 = vrsqrt.pop %v1374
      %v1407 = vrsqrt.pop %v1375
      %v1408 = vrsqrt.pop %v1376
      %v1409 = vrsqrt.pop %v1377
      %v1410 = vrsqrt.pop %v1378
      %v1411 = vrsqrt.pop %v1379
      %v1412 = vrsqrt.pop %v1380
      %v1413 = vrsqrt.pop %v1381
      %v1414 = vrsqrt.pop %v1382
      %v1415 = vrsqrt.pop %v1383
      %v1416 = vrsqrt.pop %v1384
      %v1417 = vmul.f32 %v1161, %v1385
      %v1418 = vmul.f32 %v1162, %v1386
      %v1419 = vmul.f32 %v1163, %v1387
      %v1420 = vmul.f32 %v1164, %v1388
      %v1421 = vmul.f32 %v1165, %v1389
      %v1422 = vmul.f32 %v1166, %v1390
      %v1423 = vmul.f32 %v1167, %v1391
      %v1424 = vmul.f32 %v1168, %v1392
      %v1425 = vmul.f32 %v1169, %v1393
      %v1426 = vmul.f32 %v1170, %v1394
      %v1427 = vmul.f32 %v1171, %v1395
      %v1428 = vmul.f32 %v1172, %v1396
      %v1429 = vmul.f32 %v1173, %v1397
      %v1430 = vmul.f32 %v1174, %v1398
      %v1431 = vmul.f32 %v1175, %v1399
      %v1432 = vmul.f32 %v1176, %v1400
      %v1433 = vmul.f32 %v1177, %v1401
      %v1434 = vmul.f32 %v1178, %v1402
      %v1435 = vmul.f32 %v1179, %v1403
      %v1436 = vmul.f32 %v1180, %v1404
      %v1437 = vmul.f32 %v1181, %v1405
      %v1438 = vmul.f32 %v1182, %v1406
      %v1439 = vmul.f32 %v1183, %v1407
      %v1440 = vmul.f32 %v1184, %v1408
      %v1441 = vmul.f32 %v1185, %v1409
      %v1442 = vmul.f32 %v1186, %v1410
      %v1443 = vmul.f32 %v1187, %v1411
      %v1444 = vmul.f32 %v1188, %v1412
      %v1445 = vmul.f32 %v1189, %v1413
      %v1446 = vmul.f32 %v1190, %v1414
      %v1447 = vmul.f32 %v1191, %v1415
      %v1448 = vmul.f32 %v1192, %v1416
      %v1449 = vld [vmem:[%s4 + $0x1] sm:$0x1]
      %v1450 = vlaneseq
      %v1451 = vshrl.u32 %v1450, 7
      %v1452 = vsub.s32 0, %v1451
      %v1453 = vrot.slane %v1449, %v1452
      %v1454 = vmul.f32 %v1417, %v1453
      %v1455 = vmul.f32 %v1418, %v1453
      %v1456 = vmul.f32 %v1419, %v1453
      %v1457 = vmul.f32 %v1420, %v1453
      %v1458 = vmul.f32 %v1421, %v1453
      %v1459 = vmul.f32 %v1422, %v1453
      %v1460 = vmul.f32 %v1423, %v1453
      %v1461 = vmul.f32 %v1424, %v1453
      %v1462 = vmul.f32 %v1425, %v1453
      %v1463 = vmul.f32 %v1426, %v1453
      %v1464 = vmul.f32 %v1427, %v1453
      %v1465 = vmul.f32 %v1428, %v1453
      %v1466 = vmul.f32 %v1429, %v1453
      %v1467 = vmul.f32 %v1430, %v1453
      %v1468 = vmul.f32 %v1431, %v1453
      %v1469 = vmul.f32 %v1432, %v1453
      %v1470 = vmul.f32 %v1433, %v1453
      %v1471 = vmul.f32 %v1434, %v1453
      %v1472 = vmul.f32 %v1435, %v1453
      %v1473 = vmul.f32 %v1436, %v1453
      %v1474 = vmul.f32 %v1437, %v1453
      %v1475 = vmul.f32 %v1438, %v1453
      %v1476 = vmul.f32 %v1439, %v1453
      %v1477 = vmul.f32 %v1440, %v1453
      %v1478 = vmul.f32 %v1441, %v1453
      %v1479 = vmul.f32 %v1442, %v1453
      %v1480 = vmul.f32 %v1443, %v1453
      %v1481 = vmul.f32 %v1444, %v1453
      %v1482 = vmul.f32 %v1445, %v1453
      %v1483 = vmul.f32 %v1446, %v1453
      %v1484 = vmul.f32 %v1447, %v1453
      %v1485 = vmul.f32 %v1448, %v1453
      %v1486 = vld [vmem:[%s4 + $0x2] sm:$0x1]
      %v1487 = vlaneseq
      %v1488 = vshrl.u32 %v1487, 7
      %v1489 = vsub.s32 0, %v1488
      %v1490 = vrot.slane %v1486, %v1489
      %v1491 = vadd.f32 %v1454, %v1490
      %v1492 = vadd.f32 %v1455, %v1490
      %v1493 = vadd.f32 %v1456, %v1490
      %v1494 = vadd.f32 %v1457, %v1490
      %v1495 = vadd.f32 %v1458, %v1490
      %v1496 = vadd.f32 %v1459, %v1490
      %v1497 = vadd.f32 %v1460, %v1490
      %v1498 = vadd.f32 %v1461, %v1490
      %v1499 = vadd.f32 %v1462, %v1490
      %v1500 = vadd.f32 %v1463, %v1490
      %v1501 = vadd.f32 %v1464, %v1490
      %v1502 = vadd.f32 %v1465, %v1490
      %v1503 = vadd.f32 %v1466, %v1490
      %v1504 = vadd.f32 %v1467, %v1490
      %v1505 = vadd.f32 %v1468, %v1490
      %v1506 = vadd.f32 %v1469, %v1490
      %v1507 = vadd.f32 %v1470, %v1490
      %v1508 = vadd.f32 %v1471, %v1490
      %v1509 = vadd.f32 %v1472, %v1490
      %v1510 = vadd.f32 %v1473, %v1490
      %v1511 = vadd.f32 %v1474, %v1490
      %v1512 = vadd.f32 %v1475, %v1490
      %v1513 = vadd.f32 %v1476, %v1490
      %v1514 = vadd.f32 %v1477, %v1490
      %v1515 = vadd.f32 %v1478, %v1490
      %v1516 = vadd.f32 %v1479, %v1490
      %v1517 = vadd.f32 %v1480, %v1490
      %v1518 = vadd.f32 %v1481, %v1490
      %v1519 = vadd.f32 %v1482, %v1490
      %v1520 = vadd.f32 %v1483, %v1490
      %v1521 = vadd.f32 %v1484, %v1490
      %v1522 = vadd.f32 %v1485, %v1490
      %v1523 = vmax.f32 %v1491, 0.0
      %v1524 = vmax.f32 %v1492, 0.0
      %v1525 = vmax.f32 %v1493, 0.0
      %v1526 = vmax.f32 %v1494, 0.0
      %v1527 = vmax.f32 %v1495, 0.0
      %v1528 = vmax.f32 %v1496, 0.0
      %v1529 = vmax.f32 %v1497, 0.0
      %v1530 = vmax.f32 %v1498, 0.0
      %v1531 = vmax.f32 %v1499, 0.0
      %v1532 = vmax.f32 %v1500, 0.0
      %v1533 = vmax.f32 %v1501, 0.0
      %v1534 = vmax.f32 %v1502, 0.0
      %v1535 = vmax.f32 %v1503, 0.0
      %v1536 = vmax.f32 %v1504, 0.0
      %v1537 = vmax.f32 %v1505, 0.0
      %v1538 = vmax.f32 %v1506, 0.0
      %v1539 = vmax.f32 %v1507, 0.0
      %v1540 = vmax.f32 %v1508, 0.0
      %v1541 = vmax.f32 %v1509, 0.0
      %v1542 = vmax.f32 %v1510, 0.0
      %v1543 = vmax.f32 %v1511, 0.0
      %v1544 = vmax.f32 %v1512, 0.0
      %v1545 = vmax.f32 %v1513, 0.0
      %v1546 = vmax.f32 %v1514, 0.0
      %v1547 = vmax.f32 %v1515, 0.0
      %v1548 = vmax.f32 %v1516, 0.0
      %v1549 = vmax.f32 %v1517, 0.0
      %v1550 = vmax.f32 %v1518, 0.0
      %v1551 = vmax.f32 %v1519, 0.0
      %v1552 = vmax.f32 %v1520, 0.0
      %v1553 = vmax.f32 %v1521, 0.0
      %v1554 = vmax.f32 %v1522, 0.0
      %v1555 = vld [vmem:[%s5] sm:$0xff]
      %v1556 = vld [vmem:[%s5 + $0x8] sm:$0xff]
      %v1557 = vld [vmem:[%s5 + $0x10] sm:$0xff]
      %v1558 = vld [vmem:[%s5 + $0x18] sm:$0xff]
      %v1559 = vld [vmem:[%s4 + $0x3] sm:$0x1]
      %v1560 = vlaneseq
      %v1561 = vshrl.u32 %v1560, 7
      %v1562 = vsub.s32 0, %v1561
      %v1563 = vrot.slane %v1559, %v1562
      %v1565 = vsel %vm1031, %v1523, 0
      %v1568 = vsel %vm1031, %v1524, 0
      %v1571 = vsel %vm1031, %v1525, 0
      %v1574 = vsel %vm1031, %v1526, 0
      %v1577 = vsel %vm1031, %v1527, 0
      %v1580 = vsel %vm1031, %v1528, 0
      %v1583 = vsel %vm1031, %v1529, 0
      %v1586 = vsel %vm1031, %v1530, 0
      %v1589 = vsel %vm1031, %v1531, 0
      %v1592 = vsel %vm1031, %v1532, 0
      %v1595 = vsel %vm1031, %v1533, 0
      %v1598 = vsel %vm1031, %v1534, 0
      %v1601 = vsel %vm1031, %v1535, 0
      %v1604 = vsel %vm1031, %v1536, 0
      %v1607 = vsel %vm1031, %v1537, 0
      %v1610 = vsel %vm1031, %v1538, 0
      %v1613 = vsel %vm1031, %v1539, 0
      %v1616 = vsel %vm1031, %v1540, 0
      %v1619 = vsel %vm1031, %v1541, 0
      %v1622 = vsel %vm1031, %v1542, 0
      %v1625 = vsel %vm1031, %v1543, 0
      %v1628 = vsel %vm1031, %v1544, 0
      %v1631 = vsel %vm1031, %v1545, 0
      %v1634 = vsel %vm1031, %v1546, 0
      %v1637 = vsel %vm1031, %v1547, 0
      %v1640 = vsel %vm1031, %v1548, 0
      %v1643 = vsel %vm1031, %v1549, 0
      %v1646 = vsel %vm1031, %v1550, 0
      %v1649 = vsel %vm1031, %v1551, 0
      %v1652 = vsel %vm1031, %v1552, 0
      %v1655 = vsel %vm1031, %v1553, 0
      %v1658 = vsel %vm1031, %v1554, 0
      %1660 = vmatprep.subr.mxu0 0.0
      %1661 = vmatpush1.msra.mxu0 0.0
      %1662 = vmatprep.subr.mxu0 0.0
      %1663 = vmatpush1.msra.mxu0 0.0
      %1664 = vmatprep.subr.mxu0 0.0
      %1665 = vmatpush1.msra.mxu0 0.0
      %1666 = vmatprep.subr.mxu0 0.0
      %1667 = vmatpush1.msra.mxu0 0.0
      %1668 = vmatprep.subr.mxu0 0.0
      %1669 = vmatpush1.msra.mxu0 0.0
      %1670 = vmatprep.subr.mxu0 0.0
      %1671 = vmatpush1.msra.mxu0 0.0
      %1672 = vmatprep.subr.mxu0 0.0
      %1673 = vmatpush1.msra.mxu0 0.0
      %1674 = vmatprep.subr.mxu0 0.0
      %1675 = vmatpush1.msra.mxu0 0.0
      %1676 = vmatprep.subr.mxu0 0.0
      %1677 = vmatpush1.msra.mxu0 0.0
      %1678 = vmatprep.subr.mxu0 0.0
      %1679 = vmatpush1.msra.mxu0 0.0
      %1680 = vmatprep.subr.mxu0 0.0
      %1681 = vmatpush1.msra.mxu0 0.0
      %1682 = vmatprep.subr.mxu0 0.0
      %1683 = vmatpush1.msra.mxu0 0.0
      %1684 = vmatprep.subr.mxu0 0.0
      %1685 = vmatpush1.msra.mxu0 %v1558
      %1686 = vmatprep.subr.mxu0 0.0
      %1687 = vmatpush1.msra.mxu0 %v1557
      %1688 = vmatprep.subr.mxu0 0.0
      %1689 = vmatpush1.msra.mxu0 %v1556
      %1690 = vmatprep.subr.mxu0 0.0
      %1691 = vmatpush1.msra.mxu0 %v1555
      %1692 = vmatprep.subr.mxu0 0.0
      %1693 = vmatpush2.msra.mxu0 0.0
      %1694 = vmatprep.subr.mxu0 0.0
      %1695 = vmatpush2.msra.mxu0 0.0
      %1696 = vmatprep.subr.mxu0 0.0
      %1697 = vmatpush2.msra.mxu0 0.0
      %1698 = vmatprep.subr.mxu0 0.0
      %1699 = vmatpush2.msra.mxu0 0.0
      %1700 = vmatprep.subr.mxu0 0.0
      %1701 = vmatpush2.msra.mxu0 0.0
      %1702 = vmatprep.subr.mxu0 0.0
      %1703 = vmatpush2.msra.mxu0 0.0
      %1704 = vmatprep.subr.mxu0 0.0
      %1705 = vmatpush2.msra.mxu0 0.0
      %1706 = vmatprep.subr.mxu0 0.0
      %1707 = vmatpush2.msra.mxu0 0.0
      %1708 = vmatprep.subr.mxu0 0.0
      %1709 = vmatpush2.msra.mxu0 0.0
      %1710 = vmatprep.subr.mxu0 0.0
      %1711 = vmatpush2.msra.mxu0 0.0
      %1712 = vmatprep.subr.mxu0 0.0
      %1713 = vmatpush2.msra.mxu0 0.0
      %1714 = vmatprep.subr.mxu0 0.0
      %1715 = vmatpush2.msra.mxu0 0.0
      %1716 = vmatprep.subr.mxu0 0.0
      %1717 = vmatpush2.msra.mxu0 0.0
      %1718 = vmatprep.subr.mxu0 0.0
      %1719 = vmatpush2.msra.mxu0 0.0
      %1720 = vmatprep.subr.mxu0 0.0
      %1721 = vmatpush2.msra.mxu0 0.0
      %1722 = vmatprep.subr.mxu0 0.0
      %1723 = vmatpush2.msra.mxu0 0.0
      %1724 = vmatprep.mubr.f32.mxu0 0.0
      %1725 = vmatmul.mubr.f32.gmra.mxu0 %v1565
      %v1726 = vpop.f32.mrf.mxu0
      %v1727 = vadd.f32 %v1563, %v1726
      %v1728 = vpop.f32.mrf.mxu0
      %1729 = vmatprep.mubr.f32.mxu0 0.0
      %1730 = vmatmul.mubr.f32.gmra.mxu0 %v1568
      %v1731 = vpop.f32.mrf.mxu0
      %v1732 = vadd.f32 %v1563, %v1731
      %v1733 = vpop.f32.mrf.mxu0
      %1734 = vmatprep.mubr.f32.mxu0 0.0
      %1735 = vmatmul.mubr.f32.gmra.mxu0 %v1571
      %v1736 = vpop.f32.mrf.mxu0
      %v1737 = vadd.f32 %v1563, %v1736
      %v1738 = vpop.f32.mrf.mxu0
      %1739 = vmatprep.mubr.f32.mxu0 0.0
      %1740 = vmatmul.mubr.f32.gmra.mxu0 %v1574
      %v1741 = vpop.f32.mrf.mxu0
      %v1742 = vadd.f32 %v1563, %v1741
      %v1743 = vpop.f32.mrf.mxu0
      %1744 = vmatprep.mubr.f32.mxu0 0.0
      %1745 = vmatmul.mubr.f32.gmra.mxu0 %v1577
      %v1746 = vpop.f32.mrf.mxu0
      %v1747 = vadd.f32 %v1563, %v1746
      %v1748 = vpop.f32.mrf.mxu0
      %1749 = vmatprep.mubr.f32.mxu0 0.0
      %1750 = vmatmul.mubr.f32.gmra.mxu0 %v1580
      %v1751 = vpop.f32.mrf.mxu0
      %v1752 = vadd.f32 %v1563, %v1751
      %v1753 = vpop.f32.mrf.mxu0
      %1754 = vmatprep.mubr.f32.mxu0 0.0
      %1755 = vmatmul.mubr.f32.gmra.mxu0 %v1583
      %v1756 = vpop.f32.mrf.mxu0
      %v1757 = vadd.f32 %v1563, %v1756
      %v1758 = vpop.f32.mrf.mxu0
      %1759 = vmatprep.mubr.f32.mxu0 0.0
      %1760 = vmatmul.mubr.f32.gmra.mxu0 %v1586
      %v1761 = vpop.f32.mrf.mxu0
      %v1762 = vadd.f32 %v1563, %v1761
      %v1763 = vpop.f32.mrf.mxu0
      %1764 = vmatprep.mubr.f32.mxu0 0.0
      %1765 = vmatmul.mubr.f32.gmra.mxu0 %v1589
      %v1766 = vpop.f32.mrf.mxu0
      %v1767 = vadd.f32 %v1563, %v1766
      %v1768 = vpop.f32.mrf.mxu0
      %1769 = vmatprep.mubr.f32.mxu0 0.0
      %1770 = vmatmul.mubr.f32.gmra.mxu0 %v1592
      %v1771 = vpop.f32.mrf.mxu0
      %v1772 = vadd.f32 %v1563, %v1771
      %v1773 = vpop.f32.mrf.mxu0
      %1774 = vmatprep.mubr.f32.mxu0 0.0
      %1775 = vmatmul.mubr.f32.gmra.mxu0 %v1595
      %v1776 = vpop.f32.mrf.mxu0
      %v1777 = vadd.f32 %v1563, %v1776
      %v1778 = vpop.f32.mrf.mxu0
      %1779 = vmatprep.mubr.f32.mxu0 0.0
      %1780 = vmatmul.mubr.f32.gmra.mxu0 %v1598
      %v1781 = vpop.f32.mrf.mxu0
      %v1782 = vadd.f32 %v1563, %v1781
      %v1783 = vpop.f32.mrf.mxu0
      %1784 = vmatprep.mubr.f32.mxu0 0.0
      %1785 = vmatmul.mubr.f32.gmra.mxu0 %v1601
      %v1786 = vpop.f32.mrf.mxu0
      %v1787 = vadd.f32 %v1563, %v1786
      %v1788 = vpop.f32.mrf.mxu0
      %1789 = vmatprep.mubr.f32.mxu0 0.0
      %1790 = vmatmul.mubr.f32.gmra.mxu0 %v1604
      %v1791 = vpop.f32.mrf.mxu0
      %v1792 = vadd.f32 %v1563, %v1791
      %v1793 = vpop.f32.mrf.mxu0
      %1794 = vmatprep.mubr.f32.mxu0 0.0
      %1795 = vmatmul.mubr.f32.gmra.mxu0 %v1607
      %v1796 = vpop.f32.mrf.mxu0
      %v1797 = vadd.f32 %v1563, %v1796
      %v1798 = vpop.f32.mrf.mxu0
      %1799 = vmatprep.mubr.f32.mxu0 0.0
      %1800 = vmatmul.mubr.f32.gmra.mxu0 %v1610
      %v1801 = vpop.f32.mrf.mxu0
      %v1802 = vadd.f32 %v1563, %v1801
      %v1803 = vpop.f32.mrf.mxu0
      %1804 = vmatprep.mubr.f32.mxu0 0.0
      %1805 = vmatmul.mubr.f32.gmra.mxu0 %v1613
      %v1806 = vpop.f32.mrf.mxu0
      %v1807 = vadd.f32 %v1563, %v1806
      %v1808 = vpop.f32.mrf.mxu0
      %1809 = vmatprep.mubr.f32.mxu0 0.0
      %1810 = vmatmul.mubr.f32.gmra.mxu0 %v1616
      %v1811 = vpop.f32.mrf.mxu0
      %v1812 = vadd.f32 %v1563, %v1811
      %v1813 = vpop.f32.mrf.mxu0
      %1814 = vmatprep.mubr.f32.mxu0 0.0
      %1815 = vmatmul.mubr.f32.gmra.mxu0 %v1619
      %v1816 = vpop.f32.mrf.mxu0
      %v1817 = vadd.f32 %v1563, %v1816
      %v1818 = vpop.f32.mrf.mxu0
      %1819 = vmatprep.mubr.f32.mxu0 0.0
      %1820 = vmatmul.mubr.f32.gmra.mxu0 %v1622
      %v1821 = vpop.f32.mrf.mxu0
      %v1822 = vadd.f32 %v1563, %v1821
      %v1823 = vpop.f32.mrf.mxu0
      %1824 = vmatprep.mubr.f32.mxu0 0.0
      %1825 = vmatmul.mubr.f32.gmra.mxu0 %v1625
      %v1826 = vpop.f32.mrf.mxu0
      %v1827 = vadd.f32 %v1563, %v1826
      %v1828 = vpop.f32.mrf.mxu0
      %1829 = vmatprep.mubr.f32.mxu0 0.0
      %1830 = vmatmul.mubr.f32.gmra.mxu0 %v1628
      %v1831 = vpop.f32.mrf.mxu0
      %v1832 = vadd.f32 %v1563, %v1831
      %v1833 = vpop.f32.mrf.mxu0
      %1834 = vmatprep.mubr.f32.mxu0 0.0
      %1835 = vmatmul.mubr.f32.gmra.mxu0 %v1631
      %v1836 = vpop.f32.mrf.mxu0
      %v1837 = vadd.f32 %v1563, %v1836
      %v1838 = vpop.f32.mrf.mxu0
      %1839 = vmatprep.mubr.f32.mxu0 0.0
      %1840 = vmatmul.mubr.f32.gmra.mxu0 %v1634
      %v1841 = vpop.f32.mrf.mxu0
      %v1842 = vadd.f32 %v1563, %v1841
      %v1843 = vpop.f32.mrf.mxu0
      %1844 = vmatprep.mubr.f32.mxu0 0.0
      %1845 = vmatmul.mubr.f32.gmra.mxu0 %v1637
      %v1846 = vpop.f32.mrf.mxu0
      %v1847 = vadd.f32 %v1563, %v1846
      %v1848 = vpop.f32.mrf.mxu0
      %1849 = vmatprep.mubr.f32.mxu0 0.0
      %1850 = vmatmul.mubr.f32.gmra.mxu0 %v1640
      %v1851 = vpop.f32.mrf.mxu0
      %v1852 = vadd.f32 %v1563, %v1851
      %v1853 = vpop.f32.mrf.mxu0
      %1854 = vmatprep.mubr.f32.mxu0 0.0
      %1855 = vmatmul.mubr.f32.gmra.mxu0 %v1643
      %v1856 = vpop.f32.mrf.mxu0
      %v1857 = vadd.f32 %v1563, %v1856
      %v1858 = vpop.f32.mrf.mxu0
      %1859 = vmatprep.mubr.f32.mxu0 0.0
      %1860 = vmatmul.mubr.f32.gmra.mxu0 %v1646
      %v1861 = vpop.f32.mrf.mxu0
      %v1862 = vadd.f32 %v1563, %v1861
      %v1863 = vpop.f32.mrf.mxu0
      %1864 = vmatprep.mubr.f32.mxu0 0.0
      %1865 = vmatmul.mubr.f32.gmra.mxu0 %v1649
      %v1866 = vpop.f32.mrf.mxu0
      %v1867 = vadd.f32 %v1563, %v1866
      %v1868 = vpop.f32.mrf.mxu0
      %1869 = vmatprep.mubr.f32.mxu0 0.0
      %1870 = vmatmul.mubr.f32.gmra.mxu0 %v1652
      %v1871 = vpop.f32.mrf.mxu0
      %v1872 = vadd.f32 %v1563, %v1871
      %v1873 = vpop.f32.mrf.mxu0
      %1874 = vmatprep.mubr.f32.mxu0 0.0
      %1875 = vmatmul.mubr.f32.gmra.mxu0 %v1655
      %v1876 = vpop.f32.mrf.mxu0
      %v1877 = vadd.f32 %v1563, %v1876
      %v1878 = vpop.f32.mrf.mxu0
      %1879 = vmatprep.mubr.f32.mxu0 0.0
      %1880 = vmatmul.mubr.f32.gmra.mxu0 %v1658
      %v1881 = vpop.f32.mrf.mxu0
      %v1882 = vadd.f32 %v1563, %v1881
      %v1883 = vpop.f32.mrf.mxu0
      %1884 = vdwg.mxu0
      %1885 = vst.msk [vmem:[%s275] sm:$0xff] %vm1031, %v1727
      %1886 = vst.msk [vmem:[%s275 + $0x8] sm:$0xff] %vm1031, %v1732
      %1887 = vst.msk [vmem:[%s275 + $0x10] sm:$0xff] %vm1031, %v1737
      %1888 = vst.msk [vmem:[%s275 + $0x18] sm:$0xff] %vm1031, %v1742
      %1889 = vst.msk [vmem:[%s275 + $0x20] sm:$0xff] %vm1031, %v1747
      %1890 = vst.msk [vmem:[%s275 + $0x28] sm:$0xff] %vm1031, %v1752
      %1891 = vst.msk [vmem:[%s275 + $0x30] sm:$0xff] %vm1031, %v1757
      %1892 = vst.msk [vmem:[%s275 + $0x38] sm:$0xff] %vm1031, %v1762
      %1893 = vst.msk [vmem:[%s275 + $0x40] sm:$0xff] %vm1031, %v1767
      %1894 = vst.msk [vmem:[%s275 + $0x48] sm:$0xff] %vm1031, %v1772
      %1895 = vst.msk [vmem:[%s275 + $0x50] sm:$0xff] %vm1031, %v1777
      %1896 = vst.msk [vmem:[%s275 + $0x58] sm:$0xff] %vm1031, %v1782
      %1897 = vst.msk [vmem:[%s275 + $0x60] sm:$0xff] %vm1031, %v1787
      %1898 = vst.msk [vmem:[%s275 + $0x68] sm:$0xff] %vm1031, %v1792
      %1899 = vst.msk [vmem:[%s275 + $0x70] sm:$0xff] %vm1031, %v1797
      %1900 = vst.msk [vmem:[%s275 + $0x78] sm:$0xff] %vm1031, %v1802
      %1901 = vst.msk [vmem:[%s275 + $0x80] sm:$0xff] %vm1031, %v1807
      %1902 = vst.msk [vmem:[%s275 + $0x88] sm:$0xff] %vm1031, %v1812
      %1903 = vst.msk [vmem:[%s275 + $0x90] sm:$0xff] %vm1031, %v1817
      %1904 = vst.msk [vmem:[%s275 + $0x98] sm:$0xff] %vm1031, %v1822
      %1905 = vst.msk [vmem:[%s275 + $0xa0] sm:$0xff] %vm1031, %v1827
      %1906 = vst.msk [vmem:[%s275 + $0xa8] sm:$0xff] %vm1031, %v1832
      %1907 = vst.msk [vmem:[%s275 + $0xb0] sm:$0xff] %vm1031, %v1837
      %1908 = vst.msk [vmem:[%s275 + $0xb8] sm:$0xff] %vm1031, %v1842
      %1909 = vst.msk [vmem:[%s275 + $0xc0] sm:$0xff] %vm1031, %v1847
      %1910 = vst.msk [vmem:[%s275 + $0xc8] sm:$0xff] %vm1031, %v1852
      %1911 = vst.msk [vmem:[%s275 + $0xd0] sm:$0xff] %vm1031, %v1857
      %1912 = vst.msk [vmem:[%s275 + $0xd8] sm:$0xff] %vm1031, %v1862
      %1913 = vst.msk [vmem:[%s275 + $0xe0] sm:$0xff] %vm1031, %v1867
      %1914 = vst.msk [vmem:[%s275 + $0xe8] sm:$0xff] %vm1031, %v1872
      %1915 = vst.msk [vmem:[%s275 + $0xf0] sm:$0xff] %vm1031, %v1877
      %1916 = vst.msk [vmem:[%s275 + $0xf8] sm:$0xff] %vm1031, %v1882
      %s1917 = smul.u32 32, %s17
      %p1918 = scmp.lt.s32.totalorder %s1917, 63
      %s1919 = scalar_select %p1918, %s1917, 63
      %s1920 = smul.addr %s1919, 8
      %s1921 = scalar_lea.vmem %s6, %s1920
      // Predicated region
      $region45: #{lane_node_encoder.1} parent=43 // pred_check
        %p1922 = pneg %p171
      $region46: #{lane_node_encoder.1} parent=43 // pred_check_branch
        %1924 = sbr.rel (%p1922) target = $region48
      $region47: #{lane_node_encoder.1} parent=43 // pred_region
        %s1925 = smul.u32 32, %s17
      $region48: #{lane_node_encoder.1} parent=43 // pred_fallthru
        _
    $region44: #{lane_node_encoder.1} parent=5 // pred_fallthru
      _
    %p1926 = scmp.le.s32.totalorder 2, %s12
    // Predicated region
    $region49: #{lane_node_encoder.1} parent=5 // pred_check
      %p1927 = pneg %p1926
    $region50: #{lane_node_encoder.1} parent=5 // pred_check_branch
      %1929 = sbr.rel (%p1927) target = $region52
    $region51: #{lane_node_encoder.1} parent=5 // pred_region
      %s1930 = ssub.s32 %s12, 2
      // Predicated region
      $region53: #{lane_node_encoder.1} parent=51 // pred_check
        %p1931 = pneg %p177
      $region54: #{lane_node_encoder.1} parent=51 // pred_check_branch
        %1933 = sbr.rel (%p1931) target = $region56
      $region55: #{lane_node_encoder.1} parent=51 // pred_region
        %s1934 = smul.u32 32, %s18
        %p1935 = scmp.lt.s32.totalorder %s1934, 63
        %s1936 = scalar_select %p1935, %s1934, 63
        %s1937 = smul.addr %s1936, 8
        %s1938 = scalar_lea.vmem %s6, %s1937
      $region56: #{lane_node_encoder.1} parent=51 // pred_fallthru
        _
    $region52: #{lane_node_encoder.1} parent=5 // pred_fallthru
      _
  $region6: #{lane_node_encoder.1} parent=0 // loop_footer
    %s16 = sadd.s32 1, %s12
  $region7: #{lane_node_encoder.1} parent=0 // loop_footer_branch
    %11 = sbr.rel target = $region3
  $region8: #{lane_node_encoder.1} parent=0 // loop_exit
    _

</llo_original>
